<compile_context>
chip_gen: v5e
topology: v5e:2x2
jax: 0.10.0
libtpu: 0.0.40
codegen_flags: <defaults>
</compile_context>

<pallas_src>
import functools

import jax
import jax.numpy as jnp
import numpy as np
from jax.experimental import pallas as pl
from jax.experimental.pallas import tpu as pltpu

K = 3  # every conv / convT in the module is 3x3


# ---------------------------------------------------------------------------
# Pallas kernel: the entire autoencoder forward, fused, single invocation.
# ---------------------------------------------------------------------------
def _ae_fused_kernel(x_ref,
                     a1_ref, b1_ref, s1_ref,
                     a2_ref, b2_ref, s2_ref,
                     a3_ref, b3_ref, s3_ref,
                     a4_ref, b4_ref, s4_ref,
                     enc_ref, dec_ref):
    """Activation layout: h = (N*H_in, C_in*W_in), channel-major columns.

    Per layer (exactly two MXU matmuls):
        y   = h @ B_cat                       # all 3 kernel-row taps, channel
                                              # mixing + W geometry, in one dot
        z   = A_full @ vstack_di(y[:, di])    # 0/1 block matrix: H geometry
                                              # for every tap AND every image
        out = act(z + shift)                  # bias + folded eval-mode BN
    """
    N, C, H, W = x_ref.shape

    # --- NCHW -> (N*H, C*W) channel-major layout, assembled in VMEM --------
    # (lane-concat the channel planes, sublane-concat the images; replaces the
    #  wrapper-side transposes entirely)
    h = jnp.concatenate(
        [jnp.concatenate([x_ref[n, c] for c in range(C)], axis=1)
         for n in range(N)],
        axis=0)

    def layer(h, a_ref, b_ref, s_ref, act):
        b = b_ref[...]                                    # bf16 (rows, 3*Cout*Wo)
        y = jnp.dot(h.astype(jnp.bfloat16), b,
                    preferred_element_type=jnp.float32)
        cw = b.shape[1] // K                              # Cout*Wo per tap
        y_stack = jnp.concatenate(
            [y[:, di * cw:(di + 1) * cw] for di in range(K)], axis=0)
        z = jnp.dot(a_ref[...], y_stack.astype(jnp.bfloat16),
                    preferred_element_type=jnp.float32)
        z = z + s_ref[...]                                # f32 epilogue
        if act == "relu":
            return jnp.maximum(z, 0.0)
        # sigmoid = 1/(1+exp(-x)); exp + approximate reciprocal run on the EUP.
        return pl.reciprocal(1.0 + jnp.exp(-z), approx=True)

    h1 = layer(h,  a1_ref, b1_ref, s1_ref, "relu")     # Conv2d + BN + ReLU
    h2 = layer(h1, a2_ref, b2_ref, s2_ref, "relu")     # Conv2d + ReLU (encoded)
    h3 = layer(h2, a3_ref, b3_ref, s3_ref, "relu")     # ConvT2d + BN + ReLU
    h4 = layer(h3, a4_ref, b4_ref, s4_ref, "sigmoid")  # ConvT2d + Sigmoid

    # --- write outputs directly as NCHW channel planes (no wrapper transposes)
    # (lane-dense packing only pays off at larger batch; negligible at N=2)
    _, Ce, He, We = enc_ref.shape
    for n in range(N):
        for c in range(Ce):
            enc_ref[n, c] = h2[n * He:(n + 1) * He, c * We:(c + 1) * We]
    _, Cd, Hd, Wd = dec_ref.shape
    for n in range(N):
        for c in range(Cd):
            dec_ref[n, c] = h4[n * Hd:(n + 1) * Hd, c * Wd:(c + 1) * Wd]


# ---------------------------------------------------------------------------
# One-time host-side parameter preparation (numpy; runs outside jit).
# ---------------------------------------------------------------------------
def _fold_bn(w, b, bn, out_axis, eps=1e-5):
    """Fold conv bias + eval-mode BatchNorm into (scaled weight, channel shift)."""
    w = np.asarray(w, np.float64)
    b = np.asarray(b, np.float64)
    if bn is None:
        return w.astype(np.float32), b.astype(np.float32)
    gamma, beta, mean, var = (np.asarray(t, np.float64) for t in bn)
    scale = gamma / np.sqrt(var + eps)
    shift = b * scale + beta - mean * scale
    shape = [1] * w.ndim
    shape[out_axis] = -1
    return (w * scale.reshape(shape)).astype(np.float32), shift.astype(np.float32)


def _conv_taps(w, H, W, stride, pad):
    """Conv2d weight (Cout,Cin,k,k) -> per-tap A (k,Ho,H), B (k,Cin*W,Cout*Wo).

    Channel-major rows (ci*W+wi) and columns (co*Wo+wo) so NCHW planes can be
    consumed / produced directly."""
    Cout, Cin, k, _ = w.shape
    Ho = (H + 2 * pad - k) // stride + 1
    Wo = (W + 2 * pad - k) // stride + 1
    A = np.zeros((k, Ho, H), np.float32)
    B = np.zeros((k, Cin * W, Cout * Wo), np.float32)
    rows = np.arange(Cin) * W
    cols = np.arange(Cout) * Wo
    for di in range(k):
        for ho in range(Ho):
            hi = stride * ho + di - pad
            if 0 <= hi < H:
                A[di, ho, hi] = 1.0
        for wo in range(Wo):
            for dj in range(k):
                wi = stride * wo + dj - pad
                if 0 <= wi < W:
                    B[di][np.ix_(rows + wi, cols + wo)] = w[:, :, di, dj].T
    return A, B, Ho, Wo


def _convT_taps(w, H, W, stride, pad, out_pad):
    """ConvTranspose2d weight (Cin,Cout,k,k) -> per-tap A/B, channel-major,
    with the zero-dilation / output_padding geometry folded in (no dilated
    input is ever materialized)."""
    Cin, Cout, k, _ = w.shape
    Ho = (H - 1) * stride - 2 * pad + k + out_pad
    Wo = (W - 1) * stride - 2 * pad + k + out_pad
    pad_lo = k - 1 - pad
    # equivalent direct conv over the (virtually) dilated input: flip + swap in/out
    w_eq = np.transpose(w[:, :, ::-1, ::-1], (1, 0, 2, 3))  # (Cout, Cin, k, k)
    A = np.zeros((k, Ho, H), np.float32)
    B = np.zeros((k, Cin * W, Cout * Wo), np.float32)
    rows = np.arange(Cin) * W
    cols = np.arange(Cout) * Wo
    for di in range(k):
        for ho in range(Ho):
            t = ho + di - pad_lo                    # ho + di == pad_lo + s*hi
            if t >= 0 and t % stride == 0 and (t // stride) < H:
                A[di, ho, t // stride] = 1.0
        for wo in range(Wo):
            for wi in range(W):
                dj = pad_lo + stride * wi - wo
                if 0 <= dj < k:
                    B[di][np.ix_(rows + wi, cols + wo)] = w_eq[:, :, di, dj].T
    return A, B, Ho, Wo


def _stack_layer(A_taps, B_taps, shift, N, Hin, Wo):
    """Per-tap matrices -> the three operands the kernel needs for one layer:
       A_full (N*Ho, 3*N*Hin)  0/1 block matrix, rows [n,ho], cols [di,n,hi]
       B_cat  (Cin*W, 3*Cout*Wo)  taps concatenated along output columns
       shift  (1, Cout*Wo)        channel-major bias / BN shift
    """
    k, Ho, _ = A_taps.shape
    A_full = np.zeros((N * Ho, k * N * Hin), np.float32)
    for di in range(k):
        for n in range(N):
            A_full[n * Ho:(n + 1) * Ho,
                   (di * N + n) * Hin:(di * N + n + 1) * Hin] = A_taps[di]
    B_cat = np.concatenate([B_taps[di] for di in range(k)], axis=1)
    sh = np.repeat(np.asarray(shift, np.float32), Wo)[None, :]
    return A_full, B_cat, sh


def prepare_params(p, N, H=16, W=16):
    """Fold BN/bias, lower every conv/convT to (A_full, B_cat, shift), stack batch."""
    w1, sh1 = _fold_bn(p["w1"], p["b1"], (p["g1"], p["be1"], p["m1"], p["v1"]), out_axis=0)
    A1, B1, H1, W1 = _conv_taps(w1, H, W, stride=2, pad=1)
    L1 = _stack_layer(A1, B1, sh1, N, H, W1)

    w2, sh2 = _fold_bn(p["w2"], p["b2"], None, out_axis=0)
    A2, B2, H2, W2 = _conv_taps(w2, H1, W1, stride=2, pad=1)
    L2 = _stack_layer(A2, B2, sh2, N, H1, W2)

    w3, sh3 = _fold_bn(p["dw1"], p["db1"], (p["g2"], p["be2"], p["m2"], p["v2"]), out_axis=1)
    A3, B3, H3, W3 = _convT_taps(w3, H2, W2, stride=2, pad=1, out_pad=1)
    L3 = _stack_layer(A3, B3, sh3, N, H2, W3)

    w4, sh4 = _fold_bn(p["dw2"], p["db2"], None, out_axis=1)
    A4, B4, H4, W4 = _convT_taps(w4, H3, W3, stride=2, pad=1, out_pad=1)
    L4 = _stack_layer(A4, B4, sh4, N, H3, W4)

    arrays = []
    for A_full, B_cat, sh in (L1, L2, L3, L4):
        # bf16 MXU operands (exact for the 0/1 A matrices); f32 shift/epilogue.
        arrays += [jnp.asarray(A_full, jnp.bfloat16),
                   jnp.asarray(B_cat, jnp.bfloat16),
                   jnp.asarray(sh, jnp.float32)]

    return {
        "arrays": arrays,
        "batch": N,
        "in_dims": (int(p["w1"].shape[1]), H, W),
        "enc_dims": (int(p["w2"].shape[0]), H2, W2),
        "dec_dims": (int(p["dw2"].shape[1]), H4, W4),
    }


# ---------------------------------------------------------------------------
# Forward pass (matches Autoencoder.forward: returns (encoded, decoded), NCHW)
# ---------------------------------------------------------------------------
def autoencoder_forward(x_nchw, prep):
    N = prep["batch"]
    Cin, H, W = prep["in_dims"]
    Ce, He, We = prep["enc_dims"]
    Cd, Hd, Wd = prep["dec_dims"]
    assert x_nchw.shape == (N, Cin, H, W), x_nchw.shape

    vmem = pl.BlockSpec(memory_space=pltpu.MemorySpace.VMEM)
    out_shape = (jax.ShapeDtypeStruct((N, Ce, He, We), jnp.float32),
                 jax.ShapeDtypeStruct((N, Cd, Hd, Wd), jnp.float32))

    encoded, decoded = pl.pallas_call(
        _ae_fused_kernel,
        out_shape=out_shape,
        in_specs=[vmem] * (1 + len(prep["arrays"])),
        out_specs=(vmem, vmem),
    )(x_nchw.astype(jnp.float32), *prep["arrays"])
    return encoded, decoded


# ---------------------------------------------------------------------------
# Parameters (deterministic synthetic init, shapes from Autoencoder.__init__)
# ---------------------------------------------------------------------------
def init_params(key, in_features=3):
    ks = jax.random.split(key, 20)
    p = {}
    # encoder: Conv2d(in,16,3,s2,p1) -> BN(16) -> ReLU -> Conv2d(16,8,3,s2,p1) -> ReLU
    p["w1"] = 0.1 * jax.random.normal(ks[0], (16, in_features, 3, 3), jnp.float32)
    p["b1"] = 0.1 * jax.random.normal(ks[1], (16,), jnp.float32)
    p["g1"] = jax.random.uniform(ks[2], (16,), jnp.float32, 0.5, 1.5)
    p["be1"] = 0.1 * jax.random.normal(ks[3], (16,), jnp.float32)
    p["m1"] = 0.1 * jax.random.normal(ks[4], (16,), jnp.float32)
    p["v1"] = jax.random.uniform(ks[5], (16,), jnp.float32, 0.5, 1.5)
    p["w2"] = 0.1 * jax.random.normal(ks[6], (8, 16, 3, 3), jnp.float32)
    p["b2"] = 0.1 * jax.random.normal(ks[7], (8,), jnp.float32)
    # decoder: ConvT(8,16,3,s2,p1,op1) -> BN(16) -> ReLU -> ConvT(16,in,3,s2,p1,op1) -> Sigmoid
    p["dw1"] = 0.1 * jax.random.normal(ks[8], (8, 16, 3, 3), jnp.float32)
    p["db1"] = 0.1 * jax.random.normal(ks[9], (16,), jnp.float32)
    p["g2"] = jax.random.uniform(ks[10], (16,), jnp.float32, 0.5, 1.5)
    p["be2"] = 0.1 * jax.random.normal(ks[11], (16,), jnp.float32)
    p["m2"] = 0.1 * jax.random.normal(ks[12], (16,), jnp.float32)
    p["v2"] = jax.random.uniform(ks[13], (16,), jnp.float32, 0.5, 1.5)
    p["dw2"] = 0.1 * jax.random.normal(ks[14], (16, in_features, 3, 3), jnp.float32)
    p["db2"] = 0.1 * jax.random.normal(ks[15], (in_features,), jnp.float32)
    return p


# ---------------------------------------------------------------------------
# Pure NumPy (float64) reference of the PyTorch module, eval mode.
# ---------------------------------------------------------------------------
def _np_conv2d(x, w, b, stride, pad):
    N, H, W, Cin = x.shape
    Cout, _, k, _ = w.shape
    Ho = (H + 2 * pad - k) // stride + 1
    Wo = (W + 2 * pad - k) // stride + 1
    xp = np.pad(x, ((0, 0), (pad, pad), (pad, pad), (0, 0)))
    out = np.zeros((N, Ho, Wo, Cout), x.dtype)
    for ho in range(Ho):
        for wo in range(Wo):
            patch = xp[:, ho * stride:ho * stride + k, wo * stride:wo * stride + k, :]
            out[:, ho, wo, :] = np.einsum("nijc,ocij->no", patch, w)
    return out + b


def _np_convT2d(x, w, b, stride, pad, out_pad):
    N, H, W, Cin = x.shape
    _, Cout, k, _ = w.shape
    Ho = (H - 1) * stride - 2 * pad + k + out_pad
    Wo = (W - 1) * stride - 2 * pad + k + out_pad
    out = np.zeros((N, Ho, Wo, Cout), x.dtype)
    for hi in range(H):
        for wi in range(W):
            for di in range(k):
                for dj in range(k):
                    oh = hi * stride - pad + di
                    ow = wi * stride - pad + dj
                    if 0 <= oh < Ho and 0 <= ow < Wo:
                        out[:, oh, ow, :] += x[:, hi, wi, :] @ w[:, :, di, dj]
    return out + b


def _np_bn(x, gamma, beta, mean, var, eps=1e-5):
    return (x - mean) / np.sqrt(var + eps) * gamma + beta


def _np_reference(x_nchw, p):
    g = lambda k_: np.asarray(p[k_], np.float64)
    x = np.transpose(np.asarray(x_nchw, np.float64), (0, 2, 3, 1))
    h = _np_conv2d(x, g("w1"), g("b1"), 2, 1)
    h = np.maximum(_np_bn(h, g("g1"), g("be1"), g("m1"), g("v1")), 0.0)
    enc = np.maximum(_np_conv2d(h, g("w2"), g("b2"), 2, 1), 0.0)
    d = _np_convT2d(enc, g("dw1"), g("db1"), 2, 1, 1)
    d = np.maximum(_np_bn(d, g("g2"), g("be2"), g("m2"), g("v2")), 0.0)
    dec = 1.0 / (1.0 + np.exp(-_np_convT2d(d, g("dw2"), g("db2"), 2, 1, 1)))
    return np.transpose(enc, (0, 3, 1, 2)), np.transpose(dec, (0, 3, 1, 2))


if __name__ == "__main__":
    key = jax.random.PRNGKey(0)
    kp, kx = jax.random.split(key)
    params = init_params(kp, in_features=3)

    # small deterministic input: batch=2, channels=3, spatial=16x16 (NCHW)
    N, C, H, W = 2, 3, 16, 16
    prep = prepare_params(params, N=N, H=H, W=W)
    x = jax.random.uniform(kx, (N, C, H, W), jnp.float32)

    fwd = jax.jit(functools.partial(autoencoder_forward, prep=prep))
    encoded, decoded = fwd(x)
    encoded = jax.block_until_ready(encoded)
    decoded = jax.block_until_ready(decoded)

    assert encoded.shape == (2, 8, 4, 4), encoded.shape
    assert decoded.shape == (2, 3, 16, 16), decoded.shape
    assert bool(jnp.all(jnp.isfinite(encoded))) and bool(jnp.all(jnp.isfinite(decoded)))

    # correctness vs. float64 NumPy reference of the PyTorch module (eval mode);
    # tolerance covers bf16 MXU operands + approximate-reciprocal sigmoid.
    enc_ref, dec_ref = _np_reference(x, params)
    enc_err = float(np.max(np.abs(np.asarray(encoded, np.float64) - enc_ref)))
    dec_err = float(np.max(np.abs(np.asarray(decoded, np.float64) - dec_ref)))
    assert enc_err < 5e-2 and dec_err < 5e-2, (enc_err, dec_err)

    print("KERNEL_OK")
</pallas_src>

<mosaic_0001>
module attributes {stable_mosaic.version = 11 : i64} {
  func.func @_ae_fused_kernel(%arg0: memref<2x3x16x16xf32, #tpu.memory_space<vmem>>, %arg1: memref<16x96xbf16, #tpu.memory_space<vmem>>, %arg2: memref<48x384xbf16, #tpu.memory_space<vmem>>, %arg3: memref<1x128xf32, #tpu.memory_space<vmem>>, %arg4: memref<8x48xbf16, #tpu.memory_space<vmem>>, %arg5: memref<128x96xbf16, #tpu.memory_space<vmem>>, %arg6: memref<1x32xf32, #tpu.memory_space<vmem>>, %arg7: memref<16x24xbf16, #tpu.memory_space<vmem>>, %arg8: memref<32x384xbf16, #tpu.memory_space<vmem>>, %arg9: memref<1x128xf32, #tpu.memory_space<vmem>>, %arg10: memref<32x48xbf16, #tpu.memory_space<vmem>>, %arg11: memref<128x144xbf16, #tpu.memory_space<vmem>>, %arg12: memref<1x48xf32, #tpu.memory_space<vmem>>, %arg13: memref<2x8x4x4xf32, #tpu.memory_space<vmem>>, %arg14: memref<2x3x16x16xf32, #tpu.memory_space<vmem>>) attributes {dimension_semantics = [], scalar_prefetch = 0 : i64, scratch_operands = 0 : i64, tpu.core_type = #tpu.core_type<tc>} {
    %c0 = arith.constant 0 : index
    %c0_0 = arith.constant 0 : index
    %c0_1 = arith.constant 0 : index
    %c0_2 = arith.constant 0 : index
    %0 = vector.load %arg0[%c0, %c0_0, %c0_1, %c0_2] : memref<2x3x16x16xf32, #tpu.memory_space<vmem>>, vector<1x1x16x16xf32>
    %1 = vector.shape_cast %0 : vector<1x1x16x16xf32> to vector<16x16xf32>
    %c0_3 = arith.constant 0 : index
    %c1 = arith.constant 1 : index
    %c0_4 = arith.constant 0 : index
    %c0_5 = arith.constant 0 : index
    %2 = vector.load %arg0[%c0_3, %c1, %c0_4, %c0_5] : memref<2x3x16x16xf32, #tpu.memory_space<vmem>>, vector<1x1x16x16xf32>
    %3 = vector.shape_cast %2 : vector<1x1x16x16xf32> to vector<16x16xf32>
    %c0_6 = arith.constant 0 : index
    %c2 = arith.constant 2 : index
    %c0_7 = arith.constant 0 : index
    %c0_8 = arith.constant 0 : index
    %4 = vector.load %arg0[%c0_6, %c2, %c0_7, %c0_8] : memref<2x3x16x16xf32, #tpu.memory_space<vmem>>, vector<1x1x16x16xf32>
    %5 = vector.shape_cast %4 : vector<1x1x16x16xf32> to vector<16x16xf32>
    %6 = tpu.concatenate %1, %3, %5 in 1 : vector<16x16xf32>, vector<16x16xf32>, vector<16x16xf32> -> vector<16x48xf32>
    %c1_9 = arith.constant 1 : index
    %c0_10 = arith.constant 0 : index
    %c0_11 = arith.constant 0 : index
    %c0_12 = arith.constant 0 : index
    %7 = vector.load %arg0[%c1_9, %c0_10, %c0_11, %c0_12] : memref<2x3x16x16xf32, #tpu.memory_space<vmem>>, vector<1x1x16x16xf32>
    %8 = vector.shape_cast %7 : vector<1x1x16x16xf32> to vector<16x16xf32>
    %c1_13 = arith.constant 1 : index
    %c1_14 = arith.constant 1 : index
    %c0_15 = arith.constant 0 : index
    %c0_16 = arith.constant 0 : index
    %9 = vector.load %arg0[%c1_13, %c1_14, %c0_15, %c0_16] : memref<2x3x16x16xf32, #tpu.memory_space<vmem>>, vector<1x1x16x16xf32>
    %10 = vector.shape_cast %9 : vector<1x1x16x16xf32> to vector<16x16xf32>
    %c1_17 = arith.constant 1 : index
    %c2_18 = arith.constant 2 : index
    %c0_19 = arith.constant 0 : index
    %c0_20 = arith.constant 0 : index
    %11 = vector.load %arg0[%c1_17, %c2_18, %c0_19, %c0_20] : memref<2x3x16x16xf32, #tpu.memory_space<vmem>>, vector<1x1x16x16xf32>
    %12 = vector.shape_cast %11 : vector<1x1x16x16xf32> to vector<16x16xf32>
    %13 = tpu.concatenate %8, %10, %12 in 1 : vector<16x16xf32>, vector<16x16xf32>, vector<16x16xf32> -> vector<16x48xf32>
    %14 = tpu.concatenate %6, %13 in 0 : vector<16x48xf32>, vector<16x48xf32> -> vector<32x48xf32>
    %c0_21 = arith.constant 0 : index
    %c0_22 = arith.constant 0 : index
    %15 = vector.load %arg2[%c0_21, %c0_22] : memref<48x384xbf16, #tpu.memory_space<vmem>>, vector<48x384xbf16>
    %16 = arith.truncf %14 : vector<32x48xf32> to vector<32x48xbf16>
    %cst = arith.constant dense<0.000000e+00> : vector<32x384xf32>
    %17 = tpu.matmul %16, %15, %cst {dimension_numbers = #tpu.dot_dimension_numbers<[1], [0], [0], [1], [0, 0, 1, 1], [], []>} : vector<32x48xbf16>, vector<48x384xbf16>, vector<32x384xf32> -> vector<32x384xf32>
    %18 = vector.extract_strided_slice %17 {offsets = [0, 0], sizes = [32, 128], strides = [1, 1]} : vector<32x384xf32> to vector<32x128xf32>
    %19 = vector.extract_strided_slice %17 {offsets = [0, 128], sizes = [32, 128], strides = [1, 1]} : vector<32x384xf32> to vector<32x128xf32>
    %20 = vector.extract_strided_slice %17 {offsets = [0, 256], sizes = [32, 128], strides = [1, 1]} : vector<32x384xf32> to vector<32x128xf32>
    %21 = tpu.concatenate %18, %19, %20 in 0 : vector<32x128xf32>, vector<32x128xf32>, vector<32x128xf32> -> vector<96x128xf32>
    %c0_23 = arith.constant 0 : index
    %c0_24 = arith.constant 0 : index
    %22 = vector.load %arg1[%c0_23, %c0_24] : memref<16x96xbf16, #tpu.memory_space<vmem>>, vector<16x96xbf16>
    %23 = arith.truncf %21 : vector<96x128xf32> to vector<96x128xbf16>
    %cst_25 = arith.constant dense<0.000000e+00> : vector<16x128xf32>
    %24 = tpu.matmul %22, %23, %cst_25 {dimension_numbers = #tpu.dot_dimension_numbers<[1], [0], [0], [1], [0, 0, 1, 1], [], []>} : vector<16x96xbf16>, vector<96x128xbf16>, vector<16x128xf32> -> vector<16x128xf32>
    %c0_26 = arith.constant 0 : index
    %c0_27 = arith.constant 0 : index
    %25 = vector.load %arg3[%c0_26, %c0_27] : memref<1x128xf32, #tpu.memory_space<vmem>>, vector<1x128xf32>
    %26 = vector.broadcast %25 : vector<1x128xf32> to vector<16x128xf32>
    %27 = arith.addf %24, %26 : vector<16x128xf32>
    %cst_28 = arith.constant 0.000000e+00 : f32
    %28 = vector.broadcast %cst_28 : f32 to vector<16x128xf32>
    %29 = arith.maximumf %27, %28 : vector<16x128xf32>
    %c0_29 = arith.constant 0 : index
    %c0_30 = arith.constant 0 : index
    %30 = vector.load %arg5[%c0_29, %c0_30] : memref<128x96xbf16, #tpu.memory_space<vmem>>, vector<128x96xbf16>
    %31 = arith.truncf %29 : vector<16x128xf32> to vector<16x128xbf16>
    %cst_31 = arith.constant dense<0.000000e+00> : vector<16x96xf32>
    %32 = tpu.matmul %31, %30, %cst_31 {dimension_numbers = #tpu.dot_dimension_numbers<[1], [0], [0], [1], [0, 0, 1, 1], [], []>} : vector<16x128xbf16>, vector<128x96xbf16>, vector<16x96xf32> -> vector<16x96xf32>
    %33 = vector.extract_strided_slice %32 {offsets = [0, 0], sizes = [16, 32], strides = [1, 1]} : vector<16x96xf32> to vector<16x32xf32>
    %34 = vector.extract_strided_slice %32 {offsets = [0, 32], sizes = [16, 32], strides = [1, 1]} : vector<16x96xf32> to vector<16x32xf32>
    %35 = vector.extract_strided_slice %32 {offsets = [0, 64], sizes = [16, 32], strides = [1, 1]} : vector<16x96xf32> to vector<16x32xf32>
    %36 = tpu.concatenate %33, %34, %35 in 0 : vector<16x32xf32>, vector<16x32xf32>, vector<16x32xf32> -> vector<48x32xf32>
    %c0_32 = arith.constant 0 : index
    %c0_33 = arith.constant 0 : index
    %37 = vector.load %arg4[%c0_32, %c0_33] : memref<8x48xbf16, #tpu.memory_space<vmem>>, vector<8x48xbf16>
    %38 = arith.truncf %36 : vector<48x32xf32> to vector<48x32xbf16>
    %cst_34 = arith.constant dense<0.000000e+00> : vector<8x32xf32>
    %39 = tpu.matmul %37, %38, %cst_34 {dimension_numbers = #tpu.dot_dimension_numbers<[1], [0], [0], [1], [0, 0, 1, 1], [], []>} : vector<8x48xbf16>, vector<48x32xbf16>, vector<8x32xf32> -> vector<8x32xf32>
    %c0_35 = arith.constant 0 : index
    %c0_36 = arith.constant 0 : index
    %40 = vector.load %arg6[%c0_35, %c0_36] : memref<1x32xf32, #tpu.memory_space<vmem>>, vector<1x32xf32>
    %41 = vector.broadcast %40 : vector<1x32xf32> to vector<8x32xf32>
    %42 = arith.addf %39, %41 : vector<8x32xf32>
    %cst_37 = arith.constant 0.000000e+00 : f32
    %43 = vector.broadcast %cst_37 : f32 to vector<8x32xf32>
    %44 = arith.maximumf %42, %43 : vector<8x32xf32>
    %c0_38 = arith.constant 0 : index
    %c0_39 = arith.constant 0 : index
    %45 = vector.load %arg8[%c0_38, %c0_39] : memref<32x384xbf16, #tpu.memory_space<vmem>>, vector<32x384xbf16>
    %46 = arith.truncf %44 : vector<8x32xf32> to vector<8x32xbf16>
    %cst_40 = arith.constant dense<0.000000e+00> : vector<8x384xf32>
    %47 = tpu.matmul %46, %45, %cst_40 {dimension_numbers = #tpu.dot_dimension_numbers<[1], [0], [0], [1], [0, 0, 1, 1], [], []>} : vector<8x32xbf16>, vector<32x384xbf16>, vector<8x384xf32> -> vector<8x384xf32>
    %48 = vector.extract_strided_slice %47 {offsets = [0, 0], sizes = [8, 128], strides = [1, 1]} : vector<8x384xf32> to vector<8x128xf32>
    %49 = vector.extract_strided_slice %47 {offsets = [0, 128], sizes = [8, 128], strides = [1, 1]} : vector<8x384xf32> to vector<8x128xf32>
    %50 = vector.extract_strided_slice %47 {offsets = [0, 256], sizes = [8, 128], strides = [1, 1]} : vector<8x384xf32> to vector<8x128xf32>
    %51 = tpu.concatenate %48, %49, %50 in 0 : vector<8x128xf32>, vector<8x128xf32>, vector<8x128xf32> -> vector<24x128xf32>
    %c0_41 = arith.constant 0 : index
    %c0_42 = arith.constant 0 : index
    %52 = vector.load %arg7[%c0_41, %c0_42] : memref<16x24xbf16, #tpu.memory_space<vmem>>, vector<16x24xbf16>
    %53 = arith.truncf %51 : vector<24x128xf32> to vector<24x128xbf16>
    %cst_43 = arith.constant dense<0.000000e+00> : vector<16x128xf32>
    %54 = tpu.matmul %52, %53, %cst_43 {dimension_numbers = #tpu.dot_dimension_numbers<[1], [0], [0], [1], [0, 0, 1, 1], [], []>} : vector<16x24xbf16>, vector<24x128xbf16>, vector<16x128xf32> -> vector<16x128xf32>
    %c0_44 = arith.constant 0 : index
    %c0_45 = arith.constant 0 : index
    %55 = vector.load %arg9[%c0_44, %c0_45] : memref<1x128xf32, #tpu.memory_space<vmem>>, vector<1x128xf32>
    %56 = vector.broadcast %55 : vector<1x128xf32> to vector<16x128xf32>
    %57 = arith.addf %54, %56 : vector<16x128xf32>
    %cst_46 = arith.constant 0.000000e+00 : f32
    %58 = vector.broadcast %cst_46 : f32 to vector<16x128xf32>
    %59 = arith.maximumf %57, %58 : vector<16x128xf32>
    %c0_47 = arith.constant 0 : index
    %c0_48 = arith.constant 0 : index
    %60 = vector.load %arg11[%c0_47, %c0_48] : memref<128x144xbf16, #tpu.memory_space<vmem>>, vector<128x144xbf16>
    %61 = arith.truncf %59 : vector<16x128xf32> to vector<16x128xbf16>
    %cst_49 = arith.constant dense<0.000000e+00> : vector<16x144xf32>
    %62 = tpu.matmul %61, %60, %cst_49 {dimension_numbers = #tpu.dot_dimension_numbers<[1], [0], [0], [1], [0, 0, 1, 1], [], []>} : vector<16x128xbf16>, vector<128x144xbf16>, vector<16x144xf32> -> vector<16x144xf32>
    %63 = vector.extract_strided_slice %62 {offsets = [0, 0], sizes = [16, 48], strides = [1, 1]} : vector<16x144xf32> to vector<16x48xf32>
    %64 = vector.extract_strided_slice %62 {offsets = [0, 48], sizes = [16, 48], strides = [1, 1]} : vector<16x144xf32> to vector<16x48xf32>
    %65 = vector.extract_strided_slice %62 {offsets = [0, 96], sizes = [16, 48], strides = [1, 1]} : vector<16x144xf32> to vector<16x48xf32>
    %66 = tpu.concatenate %63, %64, %65 in 0 : vector<16x48xf32>, vector<16x48xf32>, vector<16x48xf32> -> vector<48x48xf32>
    %c0_50 = arith.constant 0 : index
    %c0_51 = arith.constant 0 : index
    %67 = vector.load %arg10[%c0_50, %c0_51] : memref<32x48xbf16, #tpu.memory_space<vmem>>, vector<32x48xbf16>
    %68 = arith.truncf %66 : vector<48x48xf32> to vector<48x48xbf16>
    %cst_52 = arith.constant dense<0.000000e+00> : vector<32x48xf32>
    %69 = tpu.matmul %67, %68, %cst_52 {dimension_numbers = #tpu.dot_dimension_numbers<[1], [0], [0], [1], [0, 0, 1, 1], [], []>} : vector<32x48xbf16>, vector<48x48xbf16>, vector<32x48xf32> -> vector<32x48xf32>
    %c0_53 = arith.constant 0 : index
    %c0_54 = arith.constant 0 : index
    %70 = vector.load %arg12[%c0_53, %c0_54] : memref<1x48xf32, #tpu.memory_space<vmem>>, vector<1x48xf32>
    %71 = vector.broadcast %70 : vector<1x48xf32> to vector<32x48xf32>
    %72 = arith.addf %69, %71 : vector<32x48xf32>
    %cst_55 = arith.constant 0.000000e+00 : f32
    %73 = vector.broadcast %cst_55 : f32 to vector<32x48xf32>
    %74 = arith.subf %73, %72 : vector<32x48xf32>
    %75 = math.exp %74 : vector<32x48xf32>
    %cst_56 = arith.constant 1.000000e+00 : f32
    %76 = vector.broadcast %cst_56 : f32 to vector<32x48xf32>
    %77 = arith.addf %76, %75 : vector<32x48xf32>
    %78 = tpu.reciprocal %77 {approx = true} : vector<32x48xf32> -> vector<32x48xf32>
    %79 = vector.extract_strided_slice %44 {offsets = [0, 0], sizes = [4, 4], strides = [1, 1]} : vector<8x32xf32> to vector<4x4xf32>
    %c0_57 = arith.constant 0 : index
    %c0_58 = arith.constant 0 : index
    %c0_59 = arith.constant 0 : index
    %c0_60 = arith.constant 0 : index
    %80 = vector.load %arg13[%c0_57, %c0_58, %c0_59, %c0_60] : memref<2x8x4x4xf32, #tpu.memory_space<vmem>>, vector<1x1x4x4xf32>
    %81 = vector.shape_cast %80 : vector<1x1x4x4xf32> to vector<4x4xf32>
    %82 = vector.shape_cast %79 : vector<4x4xf32> to vector<1x1x4x4xf32>
    tpu.vector_store %arg13[%c0_57, %c0_58, %c0_59, %c0_60], %82 {strides = array<i32>} : memref<2x8x4x4xf32, #tpu.memory_space<vmem>>, vector<1x1x4x4xf32>,
    %83 = vector.extract_strided_slice %44 {offsets = [0, 4], sizes = [4, 4], strides = [1, 1]} : vector<8x32xf32> to vector<4x4xf32>
    %c0_61 = arith.constant 0 : index
    %c1_62 = arith.constant 1 : index
    %c0_63 = arith.constant 0 : index
    %c0_64 = arith.constant 0 : index
    %84 = vector.load %arg13[%c0_61, %c1_62, %c0_63, %c0_64] : memref<2x8x4x4xf32, #tpu.memory_space<vmem>>, vector<1x1x4x4xf32>
    %85 = vector.shape_cast %84 : vector<1x1x4x4xf32> to vector<4x4xf32>
    %86 = vector.shape_cast %83 : vector<4x4xf32> to vector<1x1x4x4xf32>
    tpu.vector_store %arg13[%c0_61, %c1_62, %c0_63, %c0_64], %86 {strides = array<i32>} : memref<2x8x4x4xf32, #tpu.memory_space<vmem>>, vector<1x1x4x4xf32>,
    %87 = vector.extract_strided_slice %44 {offsets = [0, 8], sizes = [4, 4], strides = [1, 1]} : vector<8x32xf32> to vector<4x4xf32>
    %c0_65 = arith.constant 0 : index
    %c2_66 = arith.constant 2 : index
    %c0_67 = arith.constant 0 : index
    %c0_68 = arith.constant 0 : index
    %88 = vector.load %arg13[%c0_65, %c2_66, %c0_67, %c0_68] : memref<2x8x4x4xf32, #tpu.memory_space<vmem>>, vector<1x1x4x4xf32>
    %89 = vector.shape_cast %88 : vector<1x1x4x4xf32> to vector<4x4xf32>
    %90 = vector.shape_cast %87 : vector<4x4xf32> to vector<1x1x4x4xf32>
    tpu.vector_store %arg13[%c0_65, %c2_66, %c0_67, %c0_68], %90 {strides = array<i32>} : memref<2x8x4x4xf32, #tpu.memory_space<vmem>>, vector<1x1x4x4xf32>,
    %91 = vector.extract_strided_slice %44 {offsets = [0, 12], sizes = [4, 4], strides = [1, 1]} : vector<8x32xf32> to vector<4x4xf32>
    %c0_69 = arith.constant 0 : index
    %c3 = arith.constant 3 : index
    %c0_70 = arith.constant 0 : index
    %c0_71 = arith.constant 0 : index
    %92 = vector.load %arg13[%c0_69, %c3, %c0_70, %c0_71] : memref<2x8x4x4xf32, #tpu.memory_space<vmem>>, vector<1x1x4x4xf32>
    %93 = vector.shape_cast %92 : vector<1x1x4x4xf32> to vector<4x4xf32>
    %94 = vector.shape_cast %91 : vector<4x4xf32> to vector<1x1x4x4xf32>
    tpu.vector_store %arg13[%c0_69, %c3, %c0_70, %c0_71], %94 {strides = array<i32>} : memref<2x8x4x4xf32, #tpu.memory_space<vmem>>, vector<1x1x4x4xf32>,
    %95 = vector.extract_strided_slice %44 {offsets = [0, 16], sizes = [4, 4], strides = [1, 1]} : vector<8x32xf32> to vector<4x4xf32>
    %c0_72 = arith.constant 0 : index
    %c4 = arith.constant 4 : index
    %c0_73 = arith.constant 0 : index
    %c0_74 = arith.constant 0 : index
    %96 = vector.load %arg13[%c0_72, %c4, %c0_73, %c0_74] : memref<2x8x4x4xf32, #tpu.memory_space<vmem>>, vector<1x1x4x4xf32>
    %97 = vector.shape_cast %96 : vector<1x1x4x4xf32> to vector<4x4xf32>
    %98 = vector.shape_cast %95 : vector<4x4xf32> to vector<1x1x4x4xf32>
    tpu.vector_store %arg13[%c0_72, %c4, %c0_73, %c0_74], %98 {strides = array<i32>} : memref<2x8x4x4xf32, #tpu.memory_space<vmem>>, vector<1x1x4x4xf32>,
    %99 = vector.extract_strided_slice %44 {offsets = [0, 20], sizes = [4, 4], strides = [1, 1]} : vector<8x32xf32> to vector<4x4xf32>
    %c0_75 = arith.constant 0 : index
    %c5 = arith.constant 5 : index
    %c0_76 = arith.constant 0 : index
    %c0_77 = arith.constant 0 : index
    %100 = vector.load %arg13[%c0_75, %c5, %c0_76, %c0_77] : memref<2x8x4x4xf32, #tpu.memory_space<vmem>>, vector<1x1x4x4xf32>
    %101 = vector.shape_cast %100 : vector<1x1x4x4xf32> to vector<4x4xf32>
    %102 = vector.shape_cast %99 : vector<4x4xf32> to vector<1x1x4x4xf32>
    tpu.vector_store %arg13[%c0_75, %c5, %c0_76, %c0_77], %102 {strides = array<i32>} : memref<2x8x4x4xf32, #tpu.memory_space<vmem>>, vector<1x1x4x4xf32>,
    %103 = vector.extract_strided_slice %44 {offsets = [0, 24], sizes = [4, 4], strides = [1, 1]} : vector<8x32xf32> to vector<4x4xf32>
    %c0_78 = arith.constant 0 : index
    %c6 = arith.constant 6 : index
    %c0_79 = arith.constant 0 : index
    %c0_80 = arith.constant 0 : index
    %104 = vector.load %arg13[%c0_78, %c6, %c0_79, %c0_80] : memref<2x8x4x4xf32, #tpu.memory_space<vmem>>, vector<1x1x4x4xf32>
    %105 = vector.shape_cast %104 : vector<1x1x4x4xf32> to vector<4x4xf32>
    %106 = vector.shape_cast %103 : vector<4x4xf32> to vector<1x1x4x4xf32>
    tpu.vector_store %arg13[%c0_78, %c6, %c0_79, %c0_80], %106 {strides = array<i32>} : memref<2x8x4x4xf32, #tpu.memory_space<vmem>>, vector<1x1x4x4xf32>,
    %107 = vector.extract_strided_slice %44 {offsets = [0, 28], sizes = [4, 4], strides = [1, 1]} : vector<8x32xf32> to vector<4x4xf32>
    %c0_81 = arith.constant 0 : index
    %c7 = arith.constant 7 : index
    %c0_82 = arith.constant 0 : index
    %c0_83 = arith.constant 0 : index
    %108 = vector.load %arg13[%c0_81, %c7, %c0_82, %c0_83] : memref<2x8x4x4xf32, #tpu.memory_space<vmem>>, vector<1x1x4x4xf32>
    %109 = vector.shape_cast %108 : vector<1x1x4x4xf32> to vector<4x4xf32>
    %110 = vector.shape_cast %107 : vector<4x4xf32> to vector<1x1x4x4xf32>
    tpu.vector_store %arg13[%c0_81, %c7, %c0_82, %c0_83], %110 {strides = array<i32>} : memref<2x8x4x4xf32, #tpu.memory_space<vmem>>, vector<1x1x4x4xf32>,
    %111 = vector.extract_strided_slice %44 {offsets = [4, 0], sizes = [4, 4], strides = [1, 1]} : vector<8x32xf32> to vector<4x4xf32>
    %c1_84 = arith.constant 1 : index
    %c0_85 = arith.constant 0 : index
    %c0_86 = arith.constant 0 : index
    %c0_87 = arith.constant 0 : index
    %112 = vector.load %arg13[%c1_84, %c0_85, %c0_86, %c0_87] : memref<2x8x4x4xf32, #tpu.memory_space<vmem>>, vector<1x1x4x4xf32>
    %113 = vector.shape_cast %112 : vector<1x1x4x4xf32> to vector<4x4xf32>
    %114 = vector.shape_cast %111 : vector<4x4xf32> to vector<1x1x4x4xf32>
    tpu.vector_store %arg13[%c1_84, %c0_85, %c0_86, %c0_87], %114 {strides = array<i32>} : memref<2x8x4x4xf32, #tpu.memory_space<vmem>>, vector<1x1x4x4xf32>,
    %115 = vector.extract_strided_slice %44 {offsets = [4, 4], sizes = [4, 4], strides = [1, 1]} : vector<8x32xf32> to vector<4x4xf32>
    %c1_88 = arith.constant 1 : index
    %c1_89 = arith.constant 1 : index
    %c0_90 = arith.constant 0 : index
    %c0_91 = arith.constant 0 : index
    %116 = vector.load %arg13[%c1_88, %c1_89, %c0_90, %c0_91] : memref<2x8x4x4xf32, #tpu.memory_space<vmem>>, vector<1x1x4x4xf32>
    %117 = vector.shape_cast %116 : vector<1x1x4x4xf32> to vector<4x4xf32>
    %118 = vector.shape_cast %115 : vector<4x4xf32> to vector<1x1x4x4xf32>
    tpu.vector_store %arg13[%c1_88, %c1_89, %c0_90, %c0_91], %118 {strides = array<i32>} : memref<2x8x4x4xf32, #tpu.memory_space<vmem>>, vector<1x1x4x4xf32>,
    %119 = vector.extract_strided_slice %44 {offsets = [4, 8], sizes = [4, 4], strides = [1, 1]} : vector<8x32xf32> to vector<4x4xf32>
    %c1_92 = arith.constant 1 : index
    %c2_93 = arith.constant 2 : index
    %c0_94 = arith.constant 0 : index
    %c0_95 = arith.constant 0 : index
    %120 = vector.load %arg13[%c1_92, %c2_93, %c0_94, %c0_95] : memref<2x8x4x4xf32, #tpu.memory_space<vmem>>, vector<1x1x4x4xf32>
    %121 = vector.shape_cast %120 : vector<1x1x4x4xf32> to vector<4x4xf32>
    %122 = vector.shape_cast %119 : vector<4x4xf32> to vector<1x1x4x4xf32>
    tpu.vector_store %arg13[%c1_92, %c2_93, %c0_94, %c0_95], %122 {strides = array<i32>} : memref<2x8x4x4xf32, #tpu.memory_space<vmem>>, vector<1x1x4x4xf32>,
    %123 = vector.extract_strided_slice %44 {offsets = [4, 12], sizes = [4, 4], strides = [1, 1]} : vector<8x32xf32> to vector<4x4xf32>
    %c1_96 = arith.constant 1 : index
    %c3_97 = arith.constant 3 : index
    %c0_98 = arith.constant 0 : index
    %c0_99 = arith.constant 0 : index
    %124 = vector.load %arg13[%c1_96, %c3_97, %c0_98, %c0_99] : memref<2x8x4x4xf32, #tpu.memory_space<vmem>>, vector<1x1x4x4xf32>
    %125 = vector.shape_cast %124 : vector<1x1x4x4xf32> to vector<4x4xf32>
    %126 = vector.shape_cast %123 : vector<4x4xf32> to vector<1x1x4x4xf32>
    tpu.vector_store %arg13[%c1_96, %c3_97, %c0_98, %c0_99], %126 {strides = array<i32>} : memref<2x8x4x4xf32, #tpu.memory_space<vmem>>, vector<1x1x4x4xf32>,
    %127 = vector.extract_strided_slice %44 {offsets = [4, 16], sizes = [4, 4], strides = [1, 1]} : vector<8x32xf32> to vector<4x4xf32>
    %c1_100 = arith.constant 1 : index
    %c4_101 = arith.constant 4 : index
    %c0_102 = arith.constant 0 : index
    %c0_103 = arith.constant 0 : index
    %128 = vector.load %arg13[%c1_100, %c4_101, %c0_102, %c0_103] : memref<2x8x4x4xf32, #tpu.memory_space<vmem>>, vector<1x1x4x4xf32>
    %129 = vector.shape_cast %128 : vector<1x1x4x4xf32> to vector<4x4xf32>
    %130 = vector.shape_cast %127 : vector<4x4xf32> to vector<1x1x4x4xf32>
    tpu.vector_store %arg13[%c1_100, %c4_101, %c0_102, %c0_103], %130 {strides = array<i32>} : memref<2x8x4x4xf32, #tpu.memory_space<vmem>>, vector<1x1x4x4xf32>,
    %131 = vector.extract_strided_slice %44 {offsets = [4, 20], sizes = [4, 4], strides = [1, 1]} : vector<8x32xf32> to vector<4x4xf32>
    %c1_104 = arith.constant 1 : index
    %c5_105 = arith.constant 5 : index
    %c0_106 = arith.constant 0 : index
    %c0_107 = arith.constant 0 : index
    %132 = vector.load %arg13[%c1_104, %c5_105, %c0_106, %c0_107] : memref<2x8x4x4xf32, #tpu.memory_space<vmem>>, vector<1x1x4x4xf32>
    %133 = vector.shape_cast %132 : vector<1x1x4x4xf32> to vector<4x4xf32>
    %134 = vector.shape_cast %131 : vector<4x4xf32> to vector<1x1x4x4xf32>
    tpu.vector_store %arg13[%c1_104, %c5_105, %c0_106, %c0_107], %134 {strides = array<i32>} : memref<2x8x4x4xf32, #tpu.memory_space<vmem>>, vector<1x1x4x4xf32>,
    %135 = vector.extract_strided_slice %44 {offsets = [4, 24], sizes = [4, 4], strides = [1, 1]} : vector<8x32xf32> to vector<4x4xf32>
    %c1_108 = arith.constant 1 : index
    %c6_109 = arith.constant 6 : index
    %c0_110 = arith.constant 0 : index
    %c0_111 = arith.constant 0 : index
    %136 = vector.load %arg13[%c1_108, %c6_109, %c0_110, %c0_111] : memref<2x8x4x4xf32, #tpu.memory_space<vmem>>, vector<1x1x4x4xf32>
    %137 = vector.shape_cast %136 : vector<1x1x4x4xf32> to vector<4x4xf32>
    %138 = vector.shape_cast %135 : vector<4x4xf32> to vector<1x1x4x4xf32>
    tpu.vector_store %arg13[%c1_108, %c6_109, %c0_110, %c0_111], %138 {strides = array<i32>} : memref<2x8x4x4xf32, #tpu.memory_space<vmem>>, vector<1x1x4x4xf32>,
    %139 = vector.extract_strided_slice %44 {offsets = [4, 28], sizes = [4, 4], strides = [1, 1]} : vector<8x32xf32> to vector<4x4xf32>
    %c1_112 = arith.constant 1 : index
    %c7_113 = arith.constant 7 : index
    %c0_114 = arith.constant 0 : index
    %c0_115 = arith.constant 0 : index
    %140 = vector.load %arg13[%c1_112, %c7_113, %c0_114, %c0_115] : memref<2x8x4x4xf32, #tpu.memory_space<vmem>>, vector<1x1x4x4xf32>
    %141 = vector.shape_cast %140 : vector<1x1x4x4xf32> to vector<4x4xf32>
    %142 = vector.shape_cast %139 : vector<4x4xf32> to vector<1x1x4x4xf32>
    tpu.vector_store %arg13[%c1_112, %c7_113, %c0_114, %c0_115], %142 {strides = array<i32>} : memref<2x8x4x4xf32, #tpu.memory_space<vmem>>, vector<1x1x4x4xf32>,
    %143 = vector.extract_strided_slice %78 {offsets = [0, 0], sizes = [16, 16], strides = [1, 1]} : vector<32x48xf32> to vector<16x16xf32>
    %c0_116 = arith.constant 0 : index
    %c0_117 = arith.constant 0 : index
    %c0_118 = arith.constant 0 : index
    %c0_119 = arith.constant 0 : index
    %144 = vector.load %arg14[%c0_116, %c0_117, %c0_118, %c0_119] : memref<2x3x16x16xf32, #tpu.memory_space<vmem>>, vector<1x1x16x16xf32>
    %145 = vector.shape_cast %144 : vector<1x1x16x16xf32> to vector<16x16xf32>
    %146 = vector.shape_cast %143 : vector<16x16xf32> to vector<1x1x16x16xf32>
    tpu.vector_store %arg14[%c0_116, %c0_117, %c0_118, %c0_119], %146 {strides = array<i32>} : memref<2x3x16x16xf32, #tpu.memory_space<vmem>>, vector<1x1x16x16xf32>,
    %147 = vector.extract_strided_slice %78 {offsets = [0, 16], sizes = [16, 16], strides = [1, 1]} : vector<32x48xf32> to vector<16x16xf32>
    %c0_120 = arith.constant 0 : index
    %c1_121 = arith.constant 1 : index
    %c0_122 = arith.constant 0 : index
    %c0_123 = arith.constant 0 : index
    %148 = vector.load %arg14[%c0_120, %c1_121, %c0_122, %c0_123] : memref<2x3x16x16xf32, #tpu.memory_space<vmem>>, vector<1x1x16x16xf32>
    %149 = vector.shape_cast %148 : vector<1x1x16x16xf32> to vector<16x16xf32>
    %150 = vector.shape_cast %147 : vector<16x16xf32> to vector<1x1x16x16xf32>
    tpu.vector_store %arg14[%c0_120, %c1_121, %c0_122, %c0_123], %150 {strides = array<i32>} : memref<2x3x16x16xf32, #tpu.memory_space<vmem>>, vector<1x1x16x16xf32>,
    %151 = vector.extract_strided_slice %78 {offsets = [0, 32], sizes = [16, 16], strides = [1, 1]} : vector<32x48xf32> to vector<16x16xf32>
    %c0_124 = arith.constant 0 : index
    %c2_125 = arith.constant 2 : index
    %c0_126 = arith.constant 0 : index
    %c0_127 = arith.constant 0 : index
    %152 = vector.load %arg14[%c0_124, %c2_125, %c0_126, %c0_127] : memref<2x3x16x16xf32, #tpu.memory_space<vmem>>, vector<1x1x16x16xf32>
    %153 = vector.shape_cast %152 : vector<1x1x16x16xf32> to vector<16x16xf32>
    %154 = vector.shape_cast %151 : vector<16x16xf32> to vector<1x1x16x16xf32>
    tpu.vector_store %arg14[%c0_124, %c2_125, %c0_126, %c0_127], %154 {strides = array<i32>} : memref<2x3x16x16xf32, #tpu.memory_space<vmem>>, vector<1x1x16x16xf32>,
    %155 = vector.extract_strided_slice %78 {offsets = [16, 0], sizes = [16, 16], strides = [1, 1]} : vector<32x48xf32> to vector<16x16xf32>
    %c1_128 = arith.constant 1 : index
    %c0_129 = arith.constant 0 : index
    %c0_130 = arith.constant 0 : index
    %c0_131 = arith.constant 0 : index
    %156 = vector.load %arg14[%c1_128, %c0_129, %c0_130, %c0_131] : memref<2x3x16x16xf32, #tpu.memory_space<vmem>>, vector<1x1x16x16xf32>
    %157 = vector.shape_cast %156 : vector<1x1x16x16xf32> to vector<16x16xf32>
    %158 = vector.shape_cast %155 : vector<16x16xf32> to vector<1x1x16x16xf32>
    tpu.vector_store %arg14[%c1_128, %c0_129, %c0_130, %c0_131], %158 {strides = array<i32>} : memref<2x3x16x16xf32, #tpu.memory_space<vmem>>, vector<1x1x16x16xf32>,
    %159 = vector.extract_strided_slice %78 {offsets = [16, 16], sizes = [16, 16], strides = [1, 1]} : vector<32x48xf32> to vector<16x16xf32>
    %c1_132 = arith.constant 1 : index
    %c1_133 = arith.constant 1 : index
    %c0_134 = arith.constant 0 : index
    %c0_135 = arith.constant 0 : index
    %160 = vector.load %arg14[%c1_132, %c1_133, %c0_134, %c0_135] : memref<2x3x16x16xf32, #tpu.memory_space<vmem>>, vector<1x1x16x16xf32>
    %161 = vector.shape_cast %160 : vector<1x1x16x16xf32> to vector<16x16xf32>
    %162 = vector.shape_cast %159 : vector<16x16xf32> to vector<1x1x16x16xf32>
    tpu.vector_store %arg14[%c1_132, %c1_133, %c0_134, %c0_135], %162 {strides = array<i32>} : memref<2x3x16x16xf32, #tpu.memory_space<vmem>>, vector<1x1x16x16xf32>,
    %163 = vector.extract_strided_slice %78 {offsets = [16, 32], sizes = [16, 16], strides = [1, 1]} : vector<32x48xf32> to vector<16x16xf32>
    %c1_136 = arith.constant 1 : index
    %c2_137 = arith.constant 2 : index
    %c0_138 = arith.constant 0 : index
    %c0_139 = arith.constant 0 : index
    %164 = vector.load %arg14[%c1_136, %c2_137, %c0_138, %c0_139] : memref<2x3x16x16xf32, #tpu.memory_space<vmem>>, vector<1x1x16x16xf32>
    %165 = vector.shape_cast %164 : vector<1x1x16x16xf32> to vector<16x16xf32>
    %166 = vector.shape_cast %163 : vector<16x16xf32> to vector<1x1x16x16xf32>
    tpu.vector_store %arg14[%c1_136, %c2_137, %c0_138, %c0_139], %166 {strides = array<i32>} : memref<2x3x16x16xf32, #tpu.memory_space<vmem>>, vector<1x1x16x16xf32>,
    return
  }
}

</mosaic_0001>

<llo_original>
// kernel: autoencoder_forward.1
$region0: #{autoencoder_forward.1}
  #allocation0 [shape = 'u32[]', space=smem, size = 0x4, offset = 0x4, fixed_abs, tag = 'smem constant byte address 0x4 - core index']
  #allocation1 [shape = 'u32[72,128]{1,0:T(1,128)}', space=vmem, size = 0x9000, scoped, tag = 'internal scratch']
  %s0 = inlined_call_operand.hbm [shape: f32[2,3,16,16], index: 0, kind: input, shape index: {}]
  %s1 = inlined_call_operand.hbm [shape: bf16[16,96], index: 1, kind: input, shape index: {}]
  %s2 = inlined_call_operand.hbm [shape: bf16[48,384], index: 2, kind: input, shape index: {}]
  %s3 = inlined_call_operand.hbm [shape: f32[1,128], index: 3, kind: input, shape index: {}]
  %s4 = inlined_call_operand.hbm [shape: bf16[8,48], index: 4, kind: input, shape index: {}]
  %s5 = inlined_call_operand.hbm [shape: bf16[128,96], index: 5, kind: input, shape index: {}]
  %s6 = inlined_call_operand.vmem [shape: f32[1,32], index: 6, kind: input, shape index: {}]
  %s7 = inlined_call_operand.hbm [shape: bf16[16,24], index: 7, kind: input, shape index: {}]
  %s8 = inlined_call_operand.hbm [shape: bf16[32,384], index: 8, kind: input, shape index: {}]
  %s9 = inlined_call_operand.vmem [shape: f32[1,128], index: 9, kind: input, shape index: {}]
  %s10 = inlined_call_operand.hbm [shape: bf16[32,48], index: 10, kind: input, shape index: {}]
  %s11 = inlined_call_operand.hbm [shape: bf16[128,144], index: 11, kind: input, shape index: {}]
  %s12 = inlined_call_operand.vmem [shape: f32[1,48], index: 12, kind: input, shape index: {}]
  %s13 = inlined_call_operand.vmem [shape: f32[2,8,4,4], index: 13, kind: output, shape index: {0}]
  %s14 = inlined_call_operand.hbm [shape: f32[2,3,16,16], index: 14, kind: output, shape index: {1}]
  %15 = xla_tuple %s13, %s14
  %s16 = sld [smem:[#allocation0]]
  $region110: #{autoencoder_forward.1} parent=0
    _
  %s18 = ssub.s32 1, %s16
  %s19 = scalar_select 0, %s18, %s16
  $region1: #{autoencoder_forward.1} parent=0
    #allocation2 [shape = 'u8[49152]{0}', space=vmem, size = 0xc000, scoped, tag = 'input window, operand 0, single buffered']
    #allocation3 [shape = 's32[1]{0}', space=sflag, size = 0x4, scoped, tag = 'scoped memory for autoencoder_forward.1']
    #allocation4 [shape = 's32[1]{0}', space=sflag, size = 0x4, scoped, tag = 'scoped memory for autoencoder_forward.1']
    #allocation5 [shape = 'u8[4096]{0}', space=vmem, size = 0x1000, scoped, tag = 'input window, operand 1, single buffered']
    #allocation6 [shape = 's32[1]{0}', space=sflag, size = 0x4, scoped, tag = 'scoped memory for autoencoder_forward.1']
    #allocation7 [shape = 'u8[36864]{0}', space=vmem, size = 0x9000, scoped, tag = 'input window, operand 2, single buffered']
    #allocation8 [shape = 'u8[512]{0}', space=vmem, size = 0x400, scoped, tag = 'input window, operand 3, single buffered']
    #allocation9 [shape = 's32[1]{0}', space=sflag, size = 0x4, scoped, tag = 'scoped memory for autoencoder_forward.1']
    #allocation10 [shape = 'u8[2048]{0}', space=vmem, size = 0x800, scoped, tag = 'input window, operand 4, single buffered']
    #allocation11 [shape = 'u8[32768]{0}', space=vmem, size = 0x8000, scoped, tag = 'input window, operand 5, single buffered']
    #allocation12 [shape = 's32[1]{0}', space=sflag, size = 0x4, scoped, tag = 'scoped memory for autoencoder_forward.1']
    #allocation13 [shape = 'u8[4096]{0}', space=vmem, size = 0x1000, scoped, tag = 'input window, operand 7, single buffered']
    #allocation14 [shape = 'u8[24576]{0}', space=vmem, size = 0x6000, scoped, tag = 'input window, operand 8, single buffered']
    #allocation15 [shape = 's32[1]{0}', space=sflag, size = 0x4, scoped, tag = 'scoped memory for autoencoder_forward.1']
    #allocation16 [shape = 'u8[8192]{0}', space=vmem, size = 0x2000, scoped, tag = 'input window, operand 10, single buffered']
    #allocation17 [shape = 'u8[65536]{0}', space=vmem, size = 0x10000, scoped, tag = 'input window, operand 11, single buffered']
    #allocation18 [shape = 's32[1]{0}', space=sflag, size = 0x4, scoped, tag = 'scoped memory for autoencoder_forward.1']
    #allocation19 [shape = 'u8[49152]{0}', space=vmem, size = 0xc000, scoped, tag = 'output window, operand 1, single buffered']
    %20 = vsyncpa [#allocation3], 0
    %21 = vsyncpa [#allocation6], 0
    %22 = vsyncpa [#allocation9], 0
    %23 = vsyncpa [#allocation12], 0
    %24 = vsyncpa [#allocation15], 0
    %25 = vsyncpa [#allocation18], 0
    %26 = vsyncpa [#allocation4], 0
    // Predicated region
    $region2: #{autoencoder_forward.1} parent=1 // pred_check
      _
    $region3: #{autoencoder_forward.1} parent=1 // pred_check_branch
      %28 = sbr.rel (0) target = $region5
    $region4: #{autoencoder_forward.1} parent=1 // pred_region
      %30 = vsyncadd [#allocation3], 0
      %s31 = sshll.u32 %s0, 4
      %s32 = int_to_ptr.hbm [resolvable:$true] %s31
      %s33 = sshll.u32 [#allocation2], 4
      %s34 = int_to_ptr.vmem [resolvable:$true] %s33
      %39 = dma.hbm_to_vmem [thread:$0]  %s32, 1536, %s34, [#allocation3], 128, 128, 8
    $region5: #{autoencoder_forward.1} parent=1 // pred_fallthru
      _
    // Predicated region
    $region6: #{autoencoder_forward.1} parent=1 // pred_check
      _
    $region7: #{autoencoder_forward.1} parent=1 // pred_check_branch
      %41 = sbr.rel (0) target = $region9
    $region8: #{autoencoder_forward.1} parent=1 // pred_region
      %43 = vsyncadd [#allocation6], 0
      %s44 = sshll.u32 %s1, 4
      %s45 = int_to_ptr.hbm [resolvable:$true] %s44
      %s46 = sshll.u32 [#allocation5], 4
      %s47 = int_to_ptr.vmem [resolvable:$true] %s46
      %52 = dma.hbm_to_vmem [thread:$0]  %s45, 128, %s47, [#allocation6], 64, 64, 4
    $region9: #{autoencoder_forward.1} parent=1 // pred_fallthru
      _
    // Predicated region
    $region10: #{autoencoder_forward.1} parent=1 // pred_check
      _
    $region11: #{autoencoder_forward.1} parent=1 // pred_check_branch
      %54 = sbr.rel (0) target = $region13
    $region12: #{autoencoder_forward.1} parent=1 // pred_region
      %56 = vsyncadd [#allocation6], 0
      %s57 = sshll.u32 %s2, 4
      %s58 = int_to_ptr.hbm [resolvable:$true] %s57
      %s59 = sshll.u32 [#allocation7], 4
      %s60 = int_to_ptr.vmem [resolvable:$true] %s59
      %65 = dma.hbm_to_vmem [thread:$0]  %s58, 1152, %s60, [#allocation6], 192, 192, 12
    $region13: #{autoencoder_forward.1} parent=1 // pred_fallthru
      _
    // Predicated region
    $region14: #{autoencoder_forward.1} parent=1 // pred_check
      _
    $region15: #{autoencoder_forward.1} parent=1 // pred_check_branch
      %67 = sbr.rel (0) target = $region17
    $region16: #{autoencoder_forward.1} parent=1 // pred_region
      %69 = vsyncadd [#allocation9], 0
      %s71 = sshll.u32 %s3, 4
      %s72 = int_to_ptr.hbm [resolvable:$true] %s71
      %s73 = sshll.u32 [#allocation8], 4
      %s74 = int_to_ptr.vmem [resolvable:$true] %s73
      %76 = dma.hbm_to_vmem [thread:$0]  %s72, 16, %s74, [#allocation9]
    $region17: #{autoencoder_forward.1} parent=1 // pred_fallthru
      _
    // Predicated region
    $region18: #{autoencoder_forward.1} parent=1 // pred_check
      _
    $region19: #{autoencoder_forward.1} parent=1 // pred_check_branch
      %78 = sbr.rel (0) target = $region21
    $region20: #{autoencoder_forward.1} parent=1 // pred_region
      %80 = vsyncadd [#allocation9], 0
      %s82 = sshll.u32 %s4, 4
      %s83 = int_to_ptr.hbm [resolvable:$true] %s82
      %s84 = sshll.u32 [#allocation10], 4
      %s85 = int_to_ptr.vmem [resolvable:$true] %s84
      %87 = dma.hbm_to_vmem [thread:$0]  %s83, 64, %s85, [#allocation9]
    $region21: #{autoencoder_forward.1} parent=1 // pred_fallthru
      _
    // Predicated region
    $region22: #{autoencoder_forward.1} parent=1 // pred_check
      _
    $region23: #{autoencoder_forward.1} parent=1 // pred_check_branch
      %89 = sbr.rel (0) target = $region25
    $region24: #{autoencoder_forward.1} parent=1 // pred_region
      %91 = vsyncadd [#allocation12], 0
      %s92 = sshll.u32 %s5, 4
      %s93 = int_to_ptr.hbm [resolvable:$true] %s92
      %s94 = sshll.u32 [#allocation11], 4
      %s95 = int_to_ptr.vmem [resolvable:$true] %s94
      %100 = dma.hbm_to_vmem [thread:$0]  %s93, 1024, %s95, [#allocation12], 64, 64, 4
    $region25: #{autoencoder_forward.1} parent=1 // pred_fallthru
      _
    // Predicated region
    $region26: #{autoencoder_forward.1} parent=1 // pred_check
      _
    $region27: #{autoencoder_forward.1} parent=1 // pred_check_branch
      %102 = sbr.rel (0) target = $region29
    $region28: #{autoencoder_forward.1} parent=1 // pred_region
      _
    $region29: #{autoencoder_forward.1} parent=1 // pred_fallthru
      _
    // Predicated region
    $region30: #{autoencoder_forward.1} parent=1 // pred_check
      _
    $region31: #{autoencoder_forward.1} parent=1 // pred_check_branch
      %104 = sbr.rel (0) target = $region33
    $region32: #{autoencoder_forward.1} parent=1 // pred_region
      %106 = vsyncadd [#allocation12], 0
      %s107 = sshll.u32 %s7, 4
      %s108 = int_to_ptr.hbm [resolvable:$true] %s107
      %s109 = sshll.u32 [#allocation13], 4
      %s110 = int_to_ptr.vmem [resolvable:$true] %s109
      %115 = dma.hbm_to_vmem [thread:$0]  %s108, 128, %s110, [#allocation12], 64, 64, 4
    $region33: #{autoencoder_forward.1} parent=1 // pred_fallthru
      _
    // Predicated region
    $region34: #{autoencoder_forward.1} parent=1 // pred_check
      _
    $region35: #{autoencoder_forward.1} parent=1 // pred_check_branch
      %117 = sbr.rel (0) target = $region37
    $region36: #{autoencoder_forward.1} parent=1 // pred_region
      %119 = vsyncadd [#allocation15], 0
      %s120 = sshll.u32 %s8, 4
      %s121 = int_to_ptr.hbm [resolvable:$true] %s120
      %s122 = sshll.u32 [#allocation14], 4
      %s123 = int_to_ptr.vmem [resolvable:$true] %s122
      %128 = dma.hbm_to_vmem [thread:$0]  %s121, 768, %s123, [#allocation15], 192, 192, 12
    $region37: #{autoencoder_forward.1} parent=1 // pred_fallthru
      _
    // Predicated region
    $region38: #{autoencoder_forward.1} parent=1 // pred_check
      _
    $region39: #{autoencoder_forward.1} parent=1 // pred_check_branch
      %130 = sbr.rel (0) target = $region41
    $region40: #{autoencoder_forward.1} parent=1 // pred_region
      _
    $region41: #{autoencoder_forward.1} parent=1 // pred_fallthru
      _
    // Predicated region
    $region42: #{autoencoder_forward.1} parent=1 // pred_check
      _
    $region43: #{autoencoder_forward.1} parent=1 // pred_check_branch
      %132 = sbr.rel (0) target = $region45
    $region44: #{autoencoder_forward.1} parent=1 // pred_region
      %134 = vsyncadd [#allocation15], 0
      %s135 = sshll.u32 %s10, 4
      %s136 = int_to_ptr.hbm [resolvable:$true] %s135
      %s137 = sshll.u32 [#allocation16], 4
      %s138 = int_to_ptr.vmem [resolvable:$true] %s137
      %143 = dma.hbm_to_vmem [thread:$0]  %s136, 256, %s138, [#allocation15], 64, 64, 4
    $region45: #{autoencoder_forward.1} parent=1 // pred_fallthru
      _
    // Predicated region
    $region46: #{autoencoder_forward.1} parent=1 // pred_check
      _
    $region47: #{autoencoder_forward.1} parent=1 // pred_check_branch
      %145 = sbr.rel (0) target = $region49
    $region48: #{autoencoder_forward.1} parent=1 // pred_region
      %147 = vsyncadd [#allocation18], 0
      %s148 = sshll.u32 %s11, 4
      %s149 = int_to_ptr.hbm [resolvable:$true] %s148
      %s150 = sshll.u32 [#allocation17], 4
      %s151 = int_to_ptr.vmem [resolvable:$true] %s150
      %156 = dma.hbm_to_vmem [thread:$0]  %s149, 2048, %s151, [#allocation18], 128, 128, 8
    $region49: #{autoencoder_forward.1} parent=1 // pred_fallthru
      _
    // Predicated region
    $region50: #{autoencoder_forward.1} parent=1 // pred_check
      _
    $region51: #{autoencoder_forward.1} parent=1 // pred_check_branch
      %158 = sbr.rel (0) target = $region53
    $region52: #{autoencoder_forward.1} parent=1 // pred_region
      _
    $region53: #{autoencoder_forward.1} parent=1 // pred_fallthru
      _
    // Predicated region
    $region54: #{autoencoder_forward.1} parent=1 // pred_check
      _
    $region55: #{autoencoder_forward.1} parent=1 // pred_check_branch
      %160 = sbr.rel (0) target = $region57
    $region56: #{autoencoder_forward.1} parent=1 // pred_region
      %162 = dma.done [#allocation3], 1536
    $region57: #{autoencoder_forward.1} parent=1 // pred_fallthru
      _
    // Predicated region
    $region58: #{autoencoder_forward.1} parent=1 // pred_check
      _
    $region59: #{autoencoder_forward.1} parent=1 // pred_check_branch
      %164 = sbr.rel (0) target = $region61
    $region60: #{autoencoder_forward.1} parent=1 // pred_region
      %166 = dma.done [#allocation6], 128
    $region61: #{autoencoder_forward.1} parent=1 // pred_fallthru
      _
    // Predicated region
    $region62: #{autoencoder_forward.1} parent=1 // pred_check
      _
    $region63: #{autoencoder_forward.1} parent=1 // pred_check_branch
      %168 = sbr.rel (0) target = $region65
    $region64: #{autoencoder_forward.1} parent=1 // pred_region
      %170 = dma.done [#allocation6], 1152
    $region65: #{autoencoder_forward.1} parent=1 // pred_fallthru
      _
    // Predicated region
    $region66: #{autoencoder_forward.1} parent=1 // pred_check
      _
    $region67: #{autoencoder_forward.1} parent=1 // pred_check_branch
      %172 = sbr.rel (0) target = $region69
    $region68: #{autoencoder_forward.1} parent=1 // pred_region
      %174 = dma.done [#allocation9], 16
    $region69: #{autoencoder_forward.1} parent=1 // pred_fallthru
      _
    // Predicated region
    $region70: #{autoencoder_forward.1} parent=1 // pred_check
      _
    $region71: #{autoencoder_forward.1} parent=1 // pred_check_branch
      %176 = sbr.rel (0) target = $region73
    $region72: #{autoencoder_forward.1} parent=1 // pred_region
      %178 = dma.done [#allocation9], 64
    $region73: #{autoencoder_forward.1} parent=1 // pred_fallthru
      _
    // Predicated region
    $region74: #{autoencoder_forward.1} parent=1 // pred_check
      _
    $region75: #{autoencoder_forward.1} parent=1 // pred_check_branch
      %180 = sbr.rel (0) target = $region77
    $region76: #{autoencoder_forward.1} parent=1 // pred_region
      %182 = dma.done [#allocation12], 1024
    $region77: #{autoencoder_forward.1} parent=1 // pred_fallthru
      _
    // Predicated region
    $region78: #{autoencoder_forward.1} parent=1 // pred_check
      _
    $region79: #{autoencoder_forward.1} parent=1 // pred_check_branch
      %184 = sbr.rel (0) target = $region81
    $region80: #{autoencoder_forward.1} parent=1 // pred_region
      %186 = dma.done [#allocation12], 128
    $region81: #{autoencoder_forward.1} parent=1 // pred_fallthru
      _
    // Predicated region
    $region82: #{autoencoder_forward.1} parent=1 // pred_check
      _
    $region83: #{autoencoder_forward.1} parent=1 // pred_check_branch
      %188 = sbr.rel (0) target = $region85
    $region84: #{autoencoder_forward.1} parent=1 // pred_region
      %190 = dma.done [#allocation15], 768
    $region85: #{autoencoder_forward.1} parent=1 // pred_fallthru
      _
    // Predicated region
    $region86: #{autoencoder_forward.1} parent=1 // pred_check
      _
    $region87: #{autoencoder_forward.1} parent=1 // pred_check_branch
      %192 = sbr.rel (0) target = $region89
    $region88: #{autoencoder_forward.1} parent=1 // pred_region
      %194 = dma.done [#allocation15], 256
    $region89: #{autoencoder_forward.1} parent=1 // pred_fallthru
      _
    // Predicated region
    $region90: #{autoencoder_forward.1} parent=1 // pred_check
      _
    $region91: #{autoencoder_forward.1} parent=1 // pred_check_branch
      %196 = sbr.rel (0) target = $region93
    $region92: #{autoencoder_forward.1} parent=1 // pred_region
      %198 = dma.done [#allocation18], 2048
    $region93: #{autoencoder_forward.1} parent=1 // pred_fallthru
      _
    %v200 = vld [vmem:[#allocation2] sm:$0xff]
    %v201 = vld [vmem:[#allocation2 + $0x8] sm:$0xff]
    %s202 = scalar_lea.vmem [#allocation2], 16
    %v203 = vld [vmem:[%s202] sm:$0xff]
    %v204 = vld [vmem:[%s202 + $0x8] sm:$0xff]
    %s205 = scalar_lea.vmem [#allocation2], 32
    %v206 = vld [vmem:[%s205] sm:$0xff]
    %v207 = vld [vmem:[%s205 + $0x8] sm:$0xff]
    %210 = vrot.lane.b32.xlu0 %v203, 16
    %v211 = vpop.permute.xlu0 %210
    %212 = vrot.lane.b32.xlu0 %v204, 16
    %v213 = vpop.permute.xlu0 %212
    %218 = vrot.lane.b32.xlu0 %v206, 32
    %v219 = vpop.permute.xlu0 %218
    %220 = vrot.lane.b32.xlu0 %v207, 32
    %v221 = vpop.permute.xlu0 %220
    %vm224 = vcmask 130048
    %v225 = vsel %vm224, %v200, %v211
    %v226 = vsel %vm224, %v201, %v213
    %vm227 = vcmask 261120
    %v228 = vsel %vm227, %v225, %v219
    %v229 = vsel %vm227, %v226, %v221
    %s230 = scalar_lea.vmem [#allocation2], 48
    %v231 = vld [vmem:[%s230] sm:$0xff]
    %v232 = vld [vmem:[%s230 + $0x8] sm:$0xff]
    %s233 = scalar_lea.vmem [#allocation2], 64
    %v234 = vld [vmem:[%s233] sm:$0xff]
    %v235 = vld [vmem:[%s233 + $0x8] sm:$0xff]
    %s236 = scalar_lea.vmem [#allocation2], 80
    %v237 = vld [vmem:[%s236] sm:$0xff]
    %v238 = vld [vmem:[%s236 + $0x8] sm:$0xff]
    %241 = vrot.lane.b32.xlu0 %v234, 16
    %v242 = vpop.permute.xlu0 %241
    %243 = vrot.lane.b32.xlu0 %v235, 16
    %v244 = vpop.permute.xlu0 %243
    %249 = vrot.lane.b32.xlu0 %v237, 32
    %v250 = vpop.permute.xlu0 %249
    %251 = vrot.lane.b32.xlu0 %v238, 32
    %v252 = vpop.permute.xlu0 %251
    %v255 = vsel %vm224, %v231, %v242
    %v256 = vsel %vm224, %v232, %v244
    %v257 = vsel %vm227, %v255, %v250
    %v258 = vsel %vm227, %v256, %v252
    %v259 = vld [vmem:[#allocation7] sm:$0xff]
    %v260 = vld [vmem:[#allocation7 + $0x8] sm:$0xf]
    %v261 = vld [vmem:[#allocation7 + $0xc] sm:$0xff]
    %v262 = vld [vmem:[#allocation7 + $0x14] sm:$0xf]
    %v263 = vld [vmem:[#allocation7 + $0x18] sm:$0xff]
    %v264 = vld [vmem:[#allocation7 + $0x20] sm:$0xf]
    %v265 = vld [vmem:[#allocation7 + $0x24] sm:$0xff]
    %v266 = vld [vmem:[#allocation7 + $0x2c] sm:$0xf]
    %v267 = vld [vmem:[#allocation7 + $0x30] sm:$0xff]
    %v268 = vld [vmem:[#allocation7 + $0x38] sm:$0xf]
    %v269 = vld [vmem:[#allocation7 + $0x3c] sm:$0xff]
    %v270 = vld [vmem:[#allocation7 + $0x44] sm:$0xf]
    %v271 = vpack.c.bf16 %v229, %v228
    %v272 = vpack.c.bf16 %v258, %v257
    %v285 = vunpack.c.l.b16 %v259
    %v286 = vunpack.c.h.b16 %v259
    %v287 = vunpack.c.l.b16 %v260
    %v288 = vunpack.c.l.b16 %v261
    %v289 = vunpack.c.h.b16 %v261
    %v290 = vunpack.c.l.b16 %v262
    %v291 = vunpack.c.l.b16 %v263
    %v292 = vunpack.c.h.b16 %v263
    %v293 = vunpack.c.l.b16 %v264
    %v294 = vunpack.c.l.b16 %v265
    %v295 = vunpack.c.h.b16 %v265
    %v296 = vunpack.c.l.b16 %v266
    %v297 = vunpack.c.l.b16 %v267
    %v298 = vunpack.c.h.b16 %v267
    %v299 = vunpack.c.l.b16 %v268
    %v300 = vunpack.c.l.b16 %v269
    %v301 = vunpack.c.h.b16 %v269
    %v302 = vunpack.c.l.b16 %v270
    %v303 = vpack.c.b16 %v288, %v285
    %v304 = vpack.c.b16 %v289, %v286
    %v305 = vpack.c.b16 %v290, %v287
    %v306 = vpack.c.b16 %v294, %v291
    %v307 = vpack.c.b16 %v295, %v292
    %v308 = vpack.c.b16 %v296, %v293
    %v309 = vpack.c.b16 %v300, %v297
    %v310 = vpack.c.b16 %v301, %v298
    %v311 = vpack.c.b16 %v302, %v299
    %vm321 = vcmask 392192
    %v323 = vsel %vm321, %v271, 0
    %v326 = vsel %vm321, %v272, 0
    %328 = vmatpush.bf16.msra.mxu0 0
    %329 = vmatpush.bf16.msra.mxu0 0
    %330 = vmatpush.bf16.msra.mxu0 0
    %331 = vmatpush.bf16.msra.mxu0 0
    %332 = vmatpush.bf16.msra.mxu0 0
    %333 = vmatpush.bf16.msra.mxu0 %v309
    %334 = vmatpush.bf16.msra.mxu0 %v306
    %335 = vmatpush.bf16.msra.mxu0 %v303
    %336 = vmatmul.bf16.gmra.mxu0 %v323
    %v337 = vpop.f32.mrf.mxu0
    %v338 = vadd.f32 0.0, %v337
    %v339 = vpop.f32.mrf.mxu0
    %v340 = vadd.f32 0.0, %v339
    %341 = vmatmul.bf16.gmra.mxu0 %v326
    %v342 = vpop.f32.mrf.mxu0
    %v343 = vadd.f32 0.0, %v342
    %v344 = vpop.f32.mrf.mxu0
    %v345 = vadd.f32 0.0, %v344
    %346 = vdwg.mxu0
    %347 = vmatpush.bf16.msra.mxu0 0
    %348 = vmatpush.bf16.msra.mxu0 0
    %349 = vmatpush.bf16.msra.mxu0 0
    %350 = vmatpush.bf16.msra.mxu0 0
    %351 = vmatpush.bf16.msra.mxu0 0
    %352 = vmatpush.bf16.msra.mxu0 %v310
    %353 = vmatpush.bf16.msra.mxu0 %v307
    %354 = vmatpush.bf16.msra.mxu0 %v304
    %355 = vmatmul.bf16.gmra.mxu0 %v323
    %v356 = vpop.f32.mrf.mxu0
    %v357 = vadd.f32 0.0, %v356
    %v358 = vpop.f32.mrf.mxu0
    %v359 = vadd.f32 0.0, %v358
    %360 = vmatmul.bf16.gmra.mxu0 %v326
    %v361 = vpop.f32.mrf.mxu0
    %v362 = vadd.f32 0.0, %v361
    %v363 = vpop.f32.mrf.mxu0
    %v364 = vadd.f32 0.0, %v363
    %365 = vdwg.mxu0
    %366 = vmatpush.bf16.msra.mxu0 0
    %367 = vmatpush.bf16.msra.mxu0 0
    %368 = vmatpush.bf16.msra.mxu0 0
    %369 = vmatpush.bf16.msra.mxu0 0
    %370 = vmatpush.bf16.msra.mxu0 0
    %371 = vmatpush.bf16.msra.mxu0 %v311
    %372 = vmatpush.bf16.msra.mxu0 %v308
    %373 = vmatpush.bf16.msra.mxu0 %v305
    %374 = vmatmul.bf16.gmra.mxu0 %v323
    %v375 = vpop.f32.mrf.mxu0
    %v376 = vadd.f32 0.0, %v375
    %v377 = vpop.f32.mrf.mxu0
    %v378 = vadd.f32 0.0, %v377
    %379 = vmatmul.bf16.gmra.mxu0 %v326
    %v380 = vpop.f32.mrf.mxu0
    %v381 = vadd.f32 0.0, %v380
    %v382 = vpop.f32.mrf.mxu0
    %v383 = vadd.f32 0.0, %v382
    %384 = vdwg.mxu0
    %v385 = vld [vmem:[#allocation5] sm:$0xf]
    %v386 = vld [vmem:[#allocation5 + $0x4] sm:$0xf]
    %v387 = vpack.c.bf16 %v340, %v338
    %v388 = vpack.c.bf16 %v345, %v343
    %v389 = vpack.c.bf16 %v359, %v357
    %v390 = vpack.c.bf16 %v364, %v362
    %v391 = vpack.c.bf16 %v378, %v376
    %v392 = vpack.c.bf16 %v383, %v381
    %v393 = vld [vmem:[#allocation8] sm:$0x1]
    %v395 = vperm.slane %v393, 0
    %v399 = vunpack.c.l.b16 %v385
    %v400 = vunpack.c.l.b16 %v386
    %v401 = vpack.c.b16 %v400, %v399
    %vm402 = vcmask 785408
    %v404 = vsel %vm402, %v401, 0
    %406 = vmatpush.bf16.msra.mxu0 0
    %407 = vmatpush.bf16.msra.mxu0 0
    %408 = vmatpush.bf16.msra.mxu0 %v392
    %409 = vmatpush.bf16.msra.mxu0 %v391
    %410 = vmatpush.bf16.msra.mxu0 %v390
    %411 = vmatpush.bf16.msra.mxu0 %v389
    %412 = vmatpush.bf16.msra.mxu0 %v388
    %413 = vmatpush.bf16.msra.mxu0 %v387
    %414 = vmatmul.bf16.gmra.mxu0 %v404
    %v415 = vpop.f32.mrf.mxu0
    %v416 = vadd.f32 %v395, %v415
    %v417 = vpop.f32.mrf.mxu0
    %v418 = vadd.f32 %v395, %v417
    %419 = vdwg.mxu0
    %v420 = vmax.f32 %v416, 0.0
    %v421 = vmax.f32 %v418, 0.0
    %v422 = vld [vmem:[#allocation11] sm:$0xf]
    %v423 = vld [vmem:[#allocation11 + $0x4] sm:$0xf]
    %v424 = vld [vmem:[#allocation11 + $0x8] sm:$0xf]
    %v425 = vld [vmem:[#allocation11 + $0xc] sm:$0xf]
    %v426 = vld [vmem:[#allocation11 + $0x10] sm:$0xf]
    %v427 = vld [vmem:[#allocation11 + $0x14] sm:$0xf]
    %v428 = vld [vmem:[#allocation11 + $0x18] sm:$0xf]
    %v429 = vld [vmem:[#allocation11 + $0x1c] sm:$0xf]
    %v430 = vld [vmem:[#allocation11 + $0x20] sm:$0xf]
    %v431 = vld [vmem:[#allocation11 + $0x24] sm:$0xf]
    %v432 = vld [vmem:[#allocation11 + $0x28] sm:$0xf]
    %v433 = vld [vmem:[#allocation11 + $0x2c] sm:$0xf]
    %v434 = vld [vmem:[#allocation11 + $0x30] sm:$0xf]
    %v435 = vld [vmem:[#allocation11 + $0x34] sm:$0xf]
    %v436 = vld [vmem:[#allocation11 + $0x38] sm:$0xf]
    %v437 = vld [vmem:[#allocation11 + $0x3c] sm:$0xf]
    %v438 = vpack.c.bf16 %v421, %v420
    %v455 = vunpack.c.l.b16 %v422
    %v456 = vunpack.c.l.b16 %v423
    %v457 = vunpack.c.l.b16 %v424
    %v458 = vunpack.c.l.b16 %v425
    %v459 = vunpack.c.l.b16 %v426
    %v460 = vunpack.c.l.b16 %v427
    %v461 = vunpack.c.l.b16 %v428
    %v462 = vunpack.c.l.b16 %v429
    %v463 = vunpack.c.l.b16 %v430
    %v464 = vunpack.c.l.b16 %v431
    %v465 = vunpack.c.l.b16 %v432
    %v466 = vunpack.c.l.b16 %v433
    %v467 = vunpack.c.l.b16 %v434
    %v468 = vunpack.c.l.b16 %v435
    %v469 = vunpack.c.l.b16 %v436
    %v470 = vunpack.c.l.b16 %v437
    %v471 = vpack.c.b16 %v456, %v455
    %v472 = vpack.c.b16 %v458, %v457
    %v473 = vpack.c.b16 %v460, %v459
    %v474 = vpack.c.b16 %v462, %v461
    %v475 = vpack.c.b16 %v464, %v463
    %v476 = vpack.c.b16 %v466, %v465
    %v477 = vpack.c.b16 %v468, %v467
    %v478 = vpack.c.b16 %v470, %v469
    %487 = vmatpush.bf16.msra.mxu0 %v478
    %488 = vmatpush.bf16.msra.mxu0 %v477
    %489 = vmatpush.bf16.msra.mxu0 %v476
    %490 = vmatpush.bf16.msra.mxu0 %v475
    %491 = vmatpush.bf16.msra.mxu0 %v474
    %492 = vmatpush.bf16.msra.mxu0 %v473
    %493 = vmatpush.bf16.msra.mxu0 %v472
    %494 = vmatpush.bf16.msra.mxu0 %v471
    %495 = vmatmul.bf16.gmra.mxu0 %v438
    %v496 = vpop.f32.mrf.mxu0
    %v497 = vadd.f32 0.0, %v496
    %v498 = vpop.f32.mrf.mxu0
    %v499 = vadd.f32 0.0, %v498
    %500 = vdwg.mxu0
    %503 = vrot.lane.b32.xlu0 %v497, 96
    %v504 = vpop.permute.xlu0 %503
    %505 = vrot.lane.b32.xlu0 %v499, 96
    %v506 = vpop.permute.xlu0 %505
    %509 = vrot.lane.b32.xlu0 %v497, 64
    %v510 = vpop.permute.xlu0 %509
    %511 = vrot.lane.b32.xlu0 %v499, 64
    %v512 = vpop.permute.xlu0 %511
    %v515 = vld [vmem:[#allocation10] sm:$0xf]
    %v516 = vpack.c.bf16 %v499, %v497
    %v517 = vpack.c.bf16 %v506, %v504
    %v518 = vpack.c.bf16 %v512, %v510
    %v519 = vld [vmem:[%s6] sm:$0x1]
    %v521 = vperm.slane %v519, 0
    %v524 = vsel %vm321, %v515, 0
    %526 = vmatpush.bf16.msra.mxu0 0
    %527 = vmatpush.bf16.msra.mxu0 0
    %528 = vmatpush.bf16.msra.mxu0 0
    %529 = vmatpush.bf16.msra.mxu0 0
    %530 = vmatpush.bf16.msra.mxu0 0
    %531 = vmatpush.bf16.msra.mxu0 %v518
    %532 = vmatpush.bf16.msra.mxu0 %v517
    %533 = vmatpush.bf16.msra.mxu0 %v516
    %534 = vmatmul.bf16.gmra.mxu0 %v524
    %v535 = vpop.f32.mrf.mxu0
    %v536 = vadd.f32 %v521, %v535
    %v537 = vpop.f32.mrf.mxu0
    %538 = vdwg.mxu0
    %v539 = vmax.f32 %v536, 0.0
    %v540 = vld [vmem:[#allocation14] sm:$0xff]
    %v541 = vld [vmem:[#allocation14 + $0x8] sm:$0xf]
    %v542 = vld [vmem:[#allocation14 + $0xc] sm:$0xff]
    %v543 = vld [vmem:[#allocation14 + $0x14] sm:$0xf]
    %v544 = vld [vmem:[#allocation14 + $0x18] sm:$0xff]
    %v545 = vld [vmem:[#allocation14 + $0x20] sm:$0xf]
    %v546 = vld [vmem:[#allocation14 + $0x24] sm:$0xff]
    %v547 = vld [vmem:[#allocation14 + $0x2c] sm:$0xf]
    %v548 = vpack.c.bf16 %v539, %v539
    %v557 = vunpack.c.l.b16 %v540
    %v558 = vunpack.c.h.b16 %v540
    %v559 = vunpack.c.l.b16 %v541
    %v560 = vunpack.c.l.b16 %v542
    %v561 = vunpack.c.h.b16 %v542
    %v562 = vunpack.c.l.b16 %v543
    %v563 = vunpack.c.l.b16 %v544
    %v564 = vunpack.c.h.b16 %v544
    %v565 = vunpack.c.l.b16 %v545
    %v566 = vunpack.c.l.b16 %v546
    %v567 = vunpack.c.h.b16 %v546
    %v568 = vunpack.c.l.b16 %v547
    %v569 = vpack.c.b16 %v560, %v557
    %v570 = vpack.c.b16 %v561, %v558
    %v571 = vpack.c.b16 %v562, %v559
    %v572 = vpack.c.b16 %v566, %v563
    %v573 = vpack.c.b16 %v567, %v564
    %v574 = vpack.c.b16 %v568, %v565
    %v582 = vsel %vm227, %v548, 0
    %584 = vmatpush.bf16.msra.mxu0 0
    %585 = vmatpush.bf16.msra.mxu0 0
    %586 = vmatpush.bf16.msra.mxu0 0
    %587 = vmatpush.bf16.msra.mxu0 0
    %588 = vmatpush.bf16.msra.mxu0 0
    %589 = vmatpush.bf16.msra.mxu0 0
    %590 = vmatpush.bf16.msra.mxu0 %v572
    %591 = vmatpush.bf16.msra.mxu0 %v569
    %592 = vmatmul.bf16.gmra.mxu0 %v582
    %v593 = vpop.f32.mrf.mxu0
    %v594 = vadd.f32 0.0, %v593
    %v595 = vpop.f32.mrf.mxu0
    %596 = vdwg.mxu0
    %597 = vmatpush.bf16.msra.mxu0 0
    %598 = vmatpush.bf16.msra.mxu0 0
    %599 = vmatpush.bf16.msra.mxu0 0
    %600 = vmatpush.bf16.msra.mxu0 0
    %601 = vmatpush.bf16.msra.mxu0 0
    %602 = vmatpush.bf16.msra.mxu0 0
    %603 = vmatpush.bf16.msra.mxu0 %v573
    %604 = vmatpush.bf16.msra.mxu0 %v570
    %605 = vmatmul.bf16.gmra.mxu0 %v582
    %v606 = vpop.f32.mrf.mxu0
    %v607 = vadd.f32 0.0, %v606
    %v608 = vpop.f32.mrf.mxu0
    %609 = vdwg.mxu0
    %610 = vmatpush.bf16.msra.mxu0 0
    %611 = vmatpush.bf16.msra.mxu0 0
    %612 = vmatpush.bf16.msra.mxu0 0
    %613 = vmatpush.bf16.msra.mxu0 0
    %614 = vmatpush.bf16.msra.mxu0 0
    %615 = vmatpush.bf16.msra.mxu0 0
    %616 = vmatpush.bf16.msra.mxu0 %v574
    %617 = vmatpush.bf16.msra.mxu0 %v571
    %618 = vmatmul.bf16.gmra.mxu0 %v582
    %v619 = vpop.f32.mrf.mxu0
    %v620 = vadd.f32 0.0, %v619
    %v621 = vpop.f32.mrf.mxu0
    %622 = vdwg.mxu0
    %v623 = vld [vmem:[#allocation13] sm:$0xf]
    %v624 = vld [vmem:[#allocation13 + $0x4] sm:$0xf]
    %v625 = vpack.c.bf16 %v607, %v594
    %v626 = vpack.c.bf16 %v620, %v620
    %v627 = vld [vmem:[%s9] sm:$0x1]
    %v629 = vperm.slane %v627, 0
    %v633 = vunpack.c.l.b16 %v623
    %v634 = vunpack.c.l.b16 %v624
    %v635 = vpack.c.b16 %v634, %v633
    %vm636 = vcmask 195584
    %v638 = vsel %vm636, %v635, 0
    %vm640 = vcmask 1043456
    %v642 = vsel %vm640, %v626, 0
    %644 = vmatpush.bf16.msra.mxu0 0
    %645 = vmatpush.bf16.msra.mxu0 0
    %646 = vmatpush.bf16.msra.mxu0 0
    %647 = vmatpush.bf16.msra.mxu0 0
    %648 = vmatpush.bf16.msra.mxu0 0
    %649 = vmatpush.bf16.msra.mxu0 0
    %650 = vmatpush.bf16.msra.mxu0 %v642
    %651 = vmatpush.bf16.msra.mxu0 %v625
    %652 = vmatmul.bf16.gmra.mxu0 %v638
    %v653 = vpop.f32.mrf.mxu0
    %v654 = vadd.f32 %v629, %v653
    %v655 = vpop.f32.mrf.mxu0
    %v656 = vadd.f32 %v629, %v655
    %657 = vdwg.mxu0
    %v658 = vmax.f32 %v654, 0.0
    %v659 = vmax.f32 %v656, 0.0
    %v660 = vld [vmem:[#allocation17] sm:$0xff]
    %v661 = vld [vmem:[#allocation17 + $0x8] sm:$0xff]
    %v662 = vld [vmem:[#allocation17 + $0x10] sm:$0xff]
    %v663 = vld [vmem:[#allocation17 + $0x18] sm:$0xff]
    %v664 = vld [vmem:[#allocation17 + $0x20] sm:$0xff]
    %v665 = vld [vmem:[#allocation17 + $0x28] sm:$0xff]
    %v666 = vld [vmem:[#allocation17 + $0x30] sm:$0xff]
    %v667 = vld [vmem:[#allocation17 + $0x38] sm:$0xff]
    %v668 = vld [vmem:[#allocation17 + $0x40] sm:$0xff]
    %v669 = vld [vmem:[#allocation17 + $0x48] sm:$0xff]
    %v670 = vld [vmem:[#allocation17 + $0x50] sm:$0xff]
    %v671 = vld [vmem:[#allocation17 + $0x58] sm:$0xff]
    %v672 = vld [vmem:[#allocation17 + $0x60] sm:$0xff]
    %v673 = vld [vmem:[#allocation17 + $0x68] sm:$0xff]
    %v674 = vld [vmem:[#allocation17 + $0x70] sm:$0xff]
    %v675 = vld [vmem:[#allocation17 + $0x78] sm:$0xff]
    %v676 = vpack.c.bf16 %v659, %v658
    %v693 = vunpack.c.l.b16 %v660
    %v694 = vunpack.c.h.b16 %v660
    %v695 = vunpack.c.l.b16 %v661
    %v696 = vunpack.c.h.b16 %v661
    %v697 = vunpack.c.l.b16 %v662
    %v698 = vunpack.c.h.b16 %v662
    %v699 = vunpack.c.l.b16 %v663
    %v700 = vunpack.c.h.b16 %v663
    %v701 = vunpack.c.l.b16 %v664
    %v702 = vunpack.c.h.b16 %v664
    %v703 = vunpack.c.l.b16 %v665
    %v704 = vunpack.c.h.b16 %v665
    %v705 = vunpack.c.l.b16 %v666
    %v706 = vunpack.c.h.b16 %v666
    %v707 = vunpack.c.l.b16 %v667
    %v708 = vunpack.c.h.b16 %v667
    %v709 = vunpack.c.l.b16 %v668
    %v710 = vunpack.c.h.b16 %v668
    %v711 = vunpack.c.l.b16 %v669
    %v712 = vunpack.c.h.b16 %v669
    %v713 = vunpack.c.l.b16 %v670
    %v714 = vunpack.c.h.b16 %v670
    %v715 = vunpack.c.l.b16 %v671
    %v716 = vunpack.c.h.b16 %v671
    %v717 = vunpack.c.l.b16 %v672
    %v718 = vunpack.c.h.b16 %v672
    %v719 = vunpack.c.l.b16 %v673
    %v720 = vunpack.c.h.b16 %v673
    %v721 = vunpack.c.l.b16 %v674
    %v722 = vunpack.c.h.b16 %v674
    %v723 = vunpack.c.l.b16 %v675
    %v724 = vunpack.c.h.b16 %v675
    %v725 = vpack.c.b16 %v695, %v693
    %v726 = vpack.c.b16 %v696, %v694
    %v727 = vpack.c.b16 %v699, %v697
    %v728 = vpack.c.b16 %v700, %v698
    %v729 = vpack.c.b16 %v703, %v701
    %v730 = vpack.c.b16 %v704, %v702
    %v731 = vpack.c.b16 %v707, %v705
    %v732 = vpack.c.b16 %v708, %v706
    %v733 = vpack.c.b16 %v711, %v709
    %v734 = vpack.c.b16 %v712, %v710
    %v735 = vpack.c.b16 %v715, %v713
    %v736 = vpack.c.b16 %v716, %v714
    %v737 = vpack.c.b16 %v719, %v717
    %v738 = vpack.c.b16 %v720, %v718
    %v739 = vpack.c.b16 %v723, %v721
    %v740 = vpack.c.b16 %v724, %v722
    %757 = vmatpush.bf16.msra.mxu0 %v739
    %758 = vmatpush.bf16.msra.mxu0 %v737
    %759 = vmatpush.bf16.msra.mxu0 %v735
    %760 = vmatpush.bf16.msra.mxu0 %v733
    %761 = vmatpush.bf16.msra.mxu0 %v731
    %762 = vmatpush.bf16.msra.mxu0 %v729
    %763 = vmatpush.bf16.msra.mxu0 %v727
    %764 = vmatpush.bf16.msra.mxu0 %v725
    %765 = vmatmul.bf16.gmra.mxu0 %v676
    %v766 = vpop.f32.mrf.mxu0
    %v767 = vadd.f32 0.0, %v766
    %v768 = vpop.f32.mrf.mxu0
    %v769 = vadd.f32 0.0, %v768
    %770 = vdwg.mxu0
    %771 = vmatpush.bf16.msra.mxu0 %v740
    %772 = vmatpush.bf16.msra.mxu0 %v738
    %773 = vmatpush.bf16.msra.mxu0 %v736
    %774 = vmatpush.bf16.msra.mxu0 %v734
    %775 = vmatpush.bf16.msra.mxu0 %v732
    %776 = vmatpush.bf16.msra.mxu0 %v730
    %777 = vmatpush.bf16.msra.mxu0 %v728
    %778 = vmatpush.bf16.msra.mxu0 %v726
    %779 = vmatmul.bf16.gmra.mxu0 %v676
    %v780 = vpop.f32.mrf.mxu0
    %v781 = vadd.f32 0.0, %v780
    %v782 = vpop.f32.mrf.mxu0
    %v783 = vadd.f32 0.0, %v782
    %784 = vdwg.mxu0
    %787 = vrot.lane.b32.xlu0 %v767, 80
    %v788 = vpop.permute.xlu0 %787
    %789 = vrot.lane.b32.xlu0 %v769, 80
    %v790 = vpop.permute.xlu0 %789
    %795 = vrot.lane.b32.xlu0 %v767, 32
    %v796 = vpop.permute.xlu0 %795
    %797 = vrot.lane.b32.xlu0 %v781, 32
    %v798 = vpop.permute.xlu0 %797
    %799 = vrot.lane.b32.xlu0 %v769, 32
    %v800 = vpop.permute.xlu0 %799
    %801 = vrot.lane.b32.xlu0 %v783, 32
    %v802 = vpop.permute.xlu0 %801
    %v803 = vsel %vm227, %v796, %v798
    %v804 = vsel %vm227, %v800, %v802
    %v807 = vld [vmem:[#allocation16] sm:$0xf]
    %v808 = vld [vmem:[#allocation16 + $0x4] sm:$0xf]
    %v809 = vld [vmem:[#allocation16 + $0x8] sm:$0xf]
    %v810 = vld [vmem:[#allocation16 + $0xc] sm:$0xf]
    %v811 = vpack.c.bf16 %v769, %v767
    %v812 = vpack.c.bf16 %v790, %v788
    %v813 = vpack.c.bf16 %v804, %v803
    %v814 = vld [vmem:[%s12] sm:$0x1]
    %v816 = vperm.slane %v814, 0
    %v822 = vunpack.c.l.b16 %v807
    %v823 = vunpack.c.l.b16 %v808
    %v824 = vunpack.c.l.b16 %v809
    %v825 = vunpack.c.l.b16 %v810
    %v826 = vpack.c.b16 %v823, %v822
    %v827 = vpack.c.b16 %v825, %v824
    %v829 = vsel %vm321, %v826, 0
    %v832 = vsel %vm321, %v827, 0
    %834 = vmatpush.bf16.msra.mxu0 0
    %835 = vmatpush.bf16.msra.mxu0 0
    %836 = vmatpush.bf16.msra.mxu0 0
    %837 = vmatpush.bf16.msra.mxu0 0
    %838 = vmatpush.bf16.msra.mxu0 0
    %839 = vmatpush.bf16.msra.mxu0 %v813
    %840 = vmatpush.bf16.msra.mxu0 %v812
    %841 = vmatpush.bf16.msra.mxu0 %v811
    %842 = vmatmul.bf16.gmra.mxu0 %v829
    %v843 = vpop.f32.mrf.mxu0
    %v844 = vadd.f32 %v816, %v843
    %v845 = vpop.f32.mrf.mxu0
    %v846 = vadd.f32 %v816, %v845
    %847 = vmatmul.bf16.gmra.mxu0 %v832
    %v848 = vpop.f32.mrf.mxu0
    %v849 = vadd.f32 %v816, %v848
    %v850 = vpop.f32.mrf.mxu0
    %v851 = vadd.f32 %v816, %v850
    %852 = vdwg.mxu0
    %v853 = vsub.f32 0.0, %v844
    %v854 = vsub.f32 0.0, %v846
    %v855 = vsub.f32 0.0, %v849
    %v856 = vsub.f32 0.0, %v851
    %v857 = vmul.f32 %v853, 1.442695
    %v858 = vpow.pop %v857
    %v859 = vmul.f32 %v854, 1.442695
    %v860 = vpow.pop %v859
    %v861 = vmul.f32 %v855, 1.442695
    %v862 = vpow.pop %v861
    %v863 = vmul.f32 %v856, 1.442695
    %v864 = vpow.pop %v863
    %v865 = vadd.f32 %v858, 1.0
    %v866 = vadd.f32 %v860, 1.0
    %v867 = vadd.f32 %v862, 1.0
    %v868 = vadd.f32 %v864, 1.0
    %v869 = vrcp.pop %v865
    %v870 = vrcp.pop %v866
    %v871 = vrcp.pop %v867
    %v872 = vrcp.pop %v868
    %vm873 = vcmask 27648
    %874 = vst.msk [vmem:[%s13] sm:$0xf] %vm873, %v539
    %876 = vrot.lane.b32.xlu0 %v539, 124
    %v877 = vpop.permute.xlu0 %876
    %s879 = scalar_lea.vmem %s13, 4
    %880 = vst.msk [vmem:[%s879] sm:$0xf] %vm873, %v877
    %881 = vrot.lane.b32.xlu0 %v539, 120
    %v882 = vpop.permute.xlu0 %881
    %s884 = scalar_lea.vmem %s13, 8
    %885 = vst.msk [vmem:[%s884] sm:$0xf] %vm873, %v882
    %886 = vrot.lane.b32.xlu0 %v539, 116
    %v887 = vpop.permute.xlu0 %886
    %s889 = scalar_lea.vmem %s13, 12
    %890 = vst.msk [vmem:[%s889] sm:$0xf] %vm873, %v887
    %891 = vrot.lane.b32.xlu0 %v539, 112
    %v892 = vpop.permute.xlu0 %891
    %s894 = scalar_lea.vmem %s13, 16
    %895 = vst.msk [vmem:[%s894] sm:$0xf] %vm873, %v892
    %896 = vrot.lane.b32.xlu0 %v539, 108
    %v897 = vpop.permute.xlu0 %896
    %s899 = scalar_lea.vmem %s13, 20
    %900 = vst.msk [vmem:[%s899] sm:$0xf] %vm873, %v897
    %901 = vrot.lane.b32.xlu0 %v539, 104
    %v902 = vpop.permute.xlu0 %901
    %s904 = scalar_lea.vmem %s13, 24
    %905 = vst.msk [vmem:[%s904] sm:$0xf] %vm873, %v902
    %906 = vrot.lane.b32.xlu0 %v539, 100
    %v907 = vpop.permute.xlu0 %906
    %s909 = scalar_lea.vmem %s13, 28
    %910 = vst.msk [vmem:[%s909] sm:$0xf] %vm873, %v907
    %s911 = scalar_lea.vmem %s13, 32
    %vm912 = vcmask 31748
    %913 = vst.msk [vmem:[%s911 - $0x4] sm:$0xf0] %vm912, %v539
    %s914 = scalar_lea.vmem %s13, 36
    %915 = vst.msk [vmem:[%s914 - $0x4] sm:$0xf0] %vm912, %v877
    %s916 = scalar_lea.vmem %s13, 40
    %917 = vst.msk [vmem:[%s916 - $0x4] sm:$0xf0] %vm912, %v882
    %s918 = scalar_lea.vmem %s13, 44
    %919 = vst.msk [vmem:[%s918 - $0x4] sm:$0xf0] %vm912, %v887
    %s920 = scalar_lea.vmem %s13, 48
    %921 = vst.msk [vmem:[%s920 - $0x4] sm:$0xf0] %vm912, %v892
    %s922 = scalar_lea.vmem %s13, 52
    %923 = vst.msk [vmem:[%s922 - $0x4] sm:$0xf0] %vm912, %v897
    %s924 = scalar_lea.vmem %s13, 56
    %925 = vst.msk [vmem:[%s924 - $0x4] sm:$0xf0] %vm912, %v902
    %s926 = scalar_lea.vmem %s13, 60
    %927 = vst.msk [vmem:[%s926 - $0x4] sm:$0xf0] %vm912, %v907
    %928 = vst.msk [vmem:[#allocation19] sm:$0xff] %vm224, %v869
    %929 = vst.msk [vmem:[#allocation19 + $0x8] sm:$0xff] %vm224, %v870
    %932 = vrot.lane.b32.xlu0 %v869, 112
    %v933 = vpop.permute.xlu0 %932
    %934 = vrot.lane.b32.xlu0 %v870, 112
    %v935 = vpop.permute.xlu0 %934
    %s938 = scalar_lea.vmem [#allocation19], 16
    %939 = vst.msk [vmem:[%s938] sm:$0xff] %vm224, %v933
    %940 = vst.msk [vmem:[%s938 + $0x8] sm:$0xff] %vm224, %v935
    %941 = vrot.lane.b32.xlu0 %v869, 96
    %v942 = vpop.permute.xlu0 %941
    %943 = vrot.lane.b32.xlu0 %v870, 96
    %v944 = vpop.permute.xlu0 %943
    %s947 = scalar_lea.vmem [#allocation19], 32
    %948 = vst.msk [vmem:[%s947] sm:$0xff] %vm224, %v942
    %949 = vst.msk [vmem:[%s947 + $0x8] sm:$0xff] %vm224, %v944
    %s950 = scalar_lea.vmem [#allocation19], 48
    %951 = vst.msk [vmem:[%s950] sm:$0xff] %vm224, %v871
    %952 = vst.msk [vmem:[%s950 + $0x8] sm:$0xff] %vm224, %v872
    %955 = vrot.lane.b32.xlu0 %v871, 112
    %v956 = vpop.permute.xlu0 %955
    %957 = vrot.lane.b32.xlu0 %v872, 112
    %v958 = vpop.permute.xlu0 %957
    %s961 = scalar_lea.vmem [#allocation19], 64
    %962 = vst.msk [vmem:[%s961] sm:$0xff] %vm224, %v956
    %963 = vst.msk [vmem:[%s961 + $0x8] sm:$0xff] %vm224, %v958
    %964 = vrot.lane.b32.xlu0 %v871, 96
    %v965 = vpop.permute.xlu0 %964
    %966 = vrot.lane.b32.xlu0 %v872, 96
    %v967 = vpop.permute.xlu0 %966
    %s970 = scalar_lea.vmem [#allocation19], 80
    %971 = vst.msk [vmem:[%s970] sm:$0xff] %vm224, %v965
    %972 = vst.msk [vmem:[%s970 + $0x8] sm:$0xff] %vm224, %v967
    // Predicated region
    $region94: #{autoencoder_forward.1} parent=1 // pred_check
      _
    $region95: #{autoencoder_forward.1} parent=1 // pred_check_branch
      %974 = sbr.rel (0) target = $region97
    $region96: #{autoencoder_forward.1} parent=1 // pred_region
      _
    $region97: #{autoencoder_forward.1} parent=1 // pred_fallthru
      _
    // Predicated region
    $region98: #{autoencoder_forward.1} parent=1 // pred_check
      _
    $region99: #{autoencoder_forward.1} parent=1 // pred_check_branch
      %976 = sbr.rel (0) target = $region101
    $region100: #{autoencoder_forward.1} parent=1 // pred_region
      %978 = vsyncadd [#allocation4], 0
      %s979 = sshll.u32 [#allocation19], 4
      %s980 = int_to_ptr.vmem [resolvable:$true] %s979
      %s981 = sshll.u32 %s14, 4
      %s982 = int_to_ptr.hbm [resolvable:$true] %s981
      %987 = dma.vmem_to_hbm [thread:$0]  %s980, 1536, %s982, [#allocation4], 128, 128, 8
    $region101: #{autoencoder_forward.1} parent=1 // pred_fallthru
      _
    // Predicated region
    $region102: #{autoencoder_forward.1} parent=1 // pred_check
      _
    $region103: #{autoencoder_forward.1} parent=1 // pred_check_branch
      %989 = sbr.rel (0) target = $region105
    $region104: #{autoencoder_forward.1} parent=1 // pred_region
      _
    $region105: #{autoencoder_forward.1} parent=1 // pred_fallthru
      _
    // Predicated region
    $region106: #{autoencoder_forward.1} parent=1 // pred_check
      _
    $region107: #{autoencoder_forward.1} parent=1 // pred_check_branch
      %991 = sbr.rel (0) target = $region109
    $region108: #{autoencoder_forward.1} parent=1 // pred_region
      %993 = dma.done [#allocation4], 1536
    $region109: #{autoencoder_forward.1} parent=1 // pred_fallthru
      _
    %994 = vsyncpa [#allocation3], 1
    %995 = vsyncpa [#allocation6], 1
    %996 = vsyncpa [#allocation9], 1
    %997 = vsyncpa [#allocation12], 1
    %998 = vsyncpa [#allocation15], 1
    %999 = vsyncpa [#allocation18], 1
    %1000 = vsyncpa [#allocation4], 1

</llo_original>
